<compile_context>
chip_gen: v7x
topology: tpu7x:2x2x1
jax: 0.10.0
libtpu: 0.0.40
codegen_flags: <defaults>
</compile_context>

<pallas_src>
import math

import jax
import jax.numpy as jnp
from jax import lax
from jax.experimental import pallas as pl
from jax.experimental.pallas import tpu as pltpu

# ----------------------------- Config ---------------------------------------
B = 2          # batch
S = 8          # target / source sequence length
D = 32         # d_model
H = 4          # num_heads
DH = D // H    # head dim
DFF = 64       # feed-forward hidden
EPS = 1e-5     # LayerNorm eps (torch default)
N = B * S      # flattened tokens, processed in ONE kernel invocation
SCALE = 1.0 / math.sqrt(DH)

# --------------------- Packed parameter-slab layout --------------------------
# One lane-dense (P_ROWS, 128) f32 slab == one prologue DMA.  Every sub-array
# starts at lane 0 and at a row offset that is a multiple of 8; weight blocks
# have 32/64 rows with the bias on the row immediately after, so all in-kernel
# slices are sublane-aligned.
P_LANES = 128
ROW_LN = 0                      # (6, D)      rows: [g1, b1, g2, b2, g3, b3]
ROW_MASK = 8                    # (H*N, N)    additive mask, pre-tiled per head
ROW_QKV1 = ROW_MASK + H * N     # (D+1, 3D)   self-attn  [Wq|Wk|Wv ; bq|bk|bv]
ROW_O1 = ROW_QKV1 + 40          # (D+1, D)    self-attn  [Wo ; bo]
ROW_QKV2 = ROW_O1 + 40          # (D+1, 3D)   cross-attn [Wq|Wk|Wv ; bq|bk|bv]
ROW_O2 = ROW_QKV2 + 40          # (D+1, D)
ROW_FF1 = ROW_O2 + 40           # (D+1, DFF)
ROW_FF2 = ROW_FF1 + 40          # (DFF+1, D)
P_ROWS = ROW_FF2 + 72           # = 344 rows (65 FF2 rows padded up to 72)


# ------------------------------ Kernel ---------------------------------------
def decoder_layer_kernel(act_ref, p_ref, out_ref):
    # act_ref: (2N, D)  rows 0:N = x, rows N:2N = encoder_output
    # p_ref:   (P_ROWS, 128) packed parameter slab (single DMA)
    # out_ref: (N, D)
    x = act_ref[0:N, :]
    enc = act_ref[N:2 * N, :]

    # Precomputed block-diagonal additive mask (keeps the flattened batch
    # elements from attending across each other), already tiled across heads.
    mask_t = p_ref[ROW_MASK:ROW_MASK + H * N, 0:N]            # (H*N, N)

    def layernorm(v, idx):
        g = p_ref[ROW_LN + idx:ROW_LN + idx + 1, 0:D]
        b = p_ref[ROW_LN + idx + 1:ROW_LN + idx + 2, 0:D]
        mu = jnp.mean(v, axis=-1, keepdims=True)
        var = jnp.mean((v - mu) ** 2, axis=-1, keepdims=True)
        return (v - mu) * lax.rsqrt(var + EPS) * g + b

    def attention(q, k, v, wo, bo):
        # q, k, v: (N, D); Q is pre-scaled (1/sqrt(DH) folded into Wq/bq).
        # 1) per-head scores, sublane-stacked into one (H*N, N) tensor.
        s = jnp.concatenate(
            [lax.dot_general(q[:, h * DH:(h + 1) * DH],
                             k[:, h * DH:(h + 1) * DH],
                             (((1,), (1,)), ((), ())),
                             preferred_element_type=jnp.float32)
             for h in range(H)], axis=0) + mask_t
        # 2) ONE softmax across all heads (1 max, 1 exp, 1 sum, 1 reciprocal).
        s = s - jnp.max(s, axis=-1, keepdims=True)
        p = jnp.exp(s)
        p = p * pl.reciprocal(jnp.sum(p, axis=-1, keepdims=True), approx=True)
        # 3) per-head P@V, lane-concatenated -> a SINGLE (N,D)@(D,D) Wo matmul.
        o_cat = jnp.concatenate(
            [jnp.dot(p[h * N:(h + 1) * N, :], v[:, h * DH:(h + 1) * DH],
                     preferred_element_type=jnp.float32)
             for h in range(H)], axis=1)
        return jnp.dot(o_cat, wo, preferred_element_type=jnp.float32) + bo

    # ---- masked self-attention block (pre-norm) ----
    # TODO(synk): src_mask / tgt_mask arguments are not supported (assumed
    # None, as in the evaluated config); only the batch-separation mask is
    # applied, and dropout is identity (eval mode).
    n1 = layernorm(x, 0)
    qkv = (jnp.dot(n1, p_ref[ROW_QKV1:ROW_QKV1 + D, 0:3 * D],
                   preferred_element_type=jnp.float32)
           + p_ref[ROW_QKV1 + D:ROW_QKV1 + D + 1, 0:3 * D])
    attn1 = attention(qkv[:, 0:D], qkv[:, D:2 * D], qkv[:, 2 * D:3 * D],
                      p_ref[ROW_O1:ROW_O1 + D, 0:D],
                      p_ref[ROW_O1 + D:ROW_O1 + D + 1, 0:D])
    x = x + attn1

    # ---- encoder-decoder cross-attention ----
    # norm2 is applied to the updated decoder stream AND the encoder stream
    # (exactly as in the PyTorch forward); both streams are normalized and
    # projected by ONE stacked (2N, D) @ (D, 3D) matmul.
    n2 = layernorm(jnp.concatenate([x, enc], axis=0), 2)       # (2N, D)
    proj2 = (jnp.dot(n2, p_ref[ROW_QKV2:ROW_QKV2 + D, 0:3 * D],
                     preferred_element_type=jnp.float32)
             + p_ref[ROW_QKV2 + D:ROW_QKV2 + D + 1, 0:3 * D])  # (2N, 3D)
    attn2 = attention(proj2[0:N, 0:D],              # Q from decoder rows
                      proj2[N:2 * N, D:2 * D],      # K from encoder rows
                      proj2[N:2 * N, 2 * D:3 * D],  # V from encoder rows
                      p_ref[ROW_O2:ROW_O2 + D, 0:D],
                      p_ref[ROW_O2 + D:ROW_O2 + D + 1, 0:D])
    x = x + attn2

    # ---- feed-forward block ----
    n3 = layernorm(x, 4)
    h1 = (jnp.dot(n3, p_ref[ROW_FF1:ROW_FF1 + D, 0:DFF],
                  preferred_element_type=jnp.float32)
          + p_ref[ROW_FF1 + D:ROW_FF1 + D + 1, 0:DFF])
    h1 = jnp.maximum(h1, 0.0)
    ff = (jnp.dot(h1, p_ref[ROW_FF2:ROW_FF2 + DFF, 0:D],
                  preferred_element_type=jnp.float32)
          + p_ref[ROW_FF2 + DFF:ROW_FF2 + DFF + 1, 0:D])
    x = x + ff

    out_ref[...] = x.astype(out_ref.dtype)


# ------------------------------ Wrapper ---------------------------------------
@jax.jit
def decoder_layer(x, enc, param_slab):
    """x, enc: (B, S, D) float32.  param_slab: (P_ROWS, 128) packed slab."""
    act = jnp.concatenate([x.reshape(N, D), enc.reshape(N, D)], axis=0)  # (2N, D)
    out = pl.pallas_call(
        decoder_layer_kernel,
        out_shape=jax.ShapeDtypeStruct((N, D), jnp.float32),
        in_specs=[pl.BlockSpec(memory_space=pltpu.MemorySpace.VMEM),
                  pl.BlockSpec(memory_space=pltpu.MemorySpace.VMEM)],
        out_specs=pl.BlockSpec(memory_space=pltpu.MemorySpace.VMEM),
    )(act, param_slab)
    return out.reshape(B, S, D)


# --------------------------- Parameter init -----------------------------------
def init_params(key):
    keys = jax.random.split(key, 32)
    i = 0

    def nxt():
        nonlocal i
        k = keys[i]
        i += 1
        return k

    def lin(din, dout):
        w = 0.02 * jax.random.normal(nxt(), (din, dout), jnp.float32)
        b = 0.01 * jax.random.normal(nxt(), (1, dout), jnp.float32)
        return w, b

    # LayerNorm params (gamma=1, beta=0 as in torch init)
    ln1_g, ln1_b = jnp.ones((1, D), jnp.float32), jnp.zeros((1, D), jnp.float32)
    ln2_g, ln2_b = jnp.ones((1, D), jnp.float32), jnp.zeros((1, D), jnp.float32)
    ln3_g, ln3_b = jnp.ones((1, D), jnp.float32), jnp.zeros((1, D), jnp.float32)

    # self-attention
    wq1, bq1 = lin(D, D); wk1, bk1 = lin(D, D); wv1, bv1 = lin(D, D); wo1, bo1 = lin(D, D)
    # cross-attention
    wq2, bq2 = lin(D, D); wk2, bk2 = lin(D, D); wv2, bv2 = lin(D, D); wo2, bo2 = lin(D, D)
    # feed-forward
    w_ff1, b_ff1 = lin(D, DFF)
    w_ff2, b_ff2 = lin(DFF, D)

    return (ln1_g, ln1_b, ln2_g, ln2_b, ln3_g, ln3_b,
            wq1, bq1, wk1, bk1, wv1, bv1, wo1, bo1,
            wq2, bq2, wk2, bk2, wv2, bv2, wo2, bo2,
            w_ff1, b_ff1, w_ff2, b_ff2)


def pack_params(p):
    """Pack 26 raw arrays + the static attention mask into ONE (P_ROWS, 128) slab."""
    (ln1_g, ln1_b, ln2_g, ln2_b, ln3_g, ln3_b,
     wq1, bq1, wk1, bk1, wv1, bv1, wo1, bo1,
     wq2, bq2, wk2, bk2, wv2, bv2, wo2, bo2,
     w_ff1, b_ff1, w_ff2, b_ff2) = p

    slab = jnp.zeros((P_ROWS, P_LANES), jnp.float32)

    def put(s, row, a):
        return s.at[row:row + a.shape[0], 0:a.shape[1]].set(a)

    # LayerNorm params
    slab = put(slab, ROW_LN,
               jnp.concatenate([ln1_g, ln1_b, ln2_g, ln2_b, ln3_g, ln3_b], axis=0))
    # Block-diagonal additive mask over the flattened batch, tiled per head.
    tok_b = jnp.arange(N, dtype=jnp.int32) // S
    blk = jnp.where(tok_b[:, None] == tok_b[None, :], 0.0, -1e30).astype(jnp.float32)
    slab = put(slab, ROW_MASK, jnp.tile(blk, (H, 1)))                     # (H*N, N)
    # Self-attention: fused QKV (softmax scale folded into Wq/bq) + Wo.
    slab = put(slab, ROW_QKV1,
               jnp.concatenate([jnp.concatenate([wq1 * SCALE, wk1, wv1], axis=1),
                                jnp.concatenate([bq1 * SCALE, bk1, bv1], axis=1)],
                               axis=0))                                   # (D+1, 3D)
    slab = put(slab, ROW_O1, jnp.concatenate([wo1, bo1], axis=0))         # (D+1, D)
    # Cross-attention: fused QKV + Wo.
    slab = put(slab, ROW_QKV2,
               jnp.concatenate([jnp.concatenate([wq2 * SCALE, wk2, wv2], axis=1),
                                jnp.concatenate([bq2 * SCALE, bk2, bv2], axis=1)],
                               axis=0))                                   # (D+1, 3D)
    slab = put(slab, ROW_O2, jnp.concatenate([wo2, bo2], axis=0))         # (D+1, D)
    # Feed-forward.
    slab = put(slab, ROW_FF1, jnp.concatenate([w_ff1, b_ff1], axis=0))    # (D+1, DFF)
    slab = put(slab, ROW_FF2, jnp.concatenate([w_ff2, b_ff2], axis=0))    # (DFF+1, D)
    return slab


# --------------------------- Pure-JAX reference --------------------------------
def ref_decoder_layer(x, enc, params):
    (ln1_g, ln1_b, ln2_g, ln2_b, ln3_g, ln3_b,
     wq1, bq1, wk1, bk1, wv1, bv1, wo1, bo1,
     wq2, bq2, wk2, bk2, wv2, bv2, wo2, bo2,
     w_ff1, b_ff1, w_ff2, b_ff2) = params

    def ln(v, g, b):
        mu = jnp.mean(v, axis=-1, keepdims=True)
        var = jnp.mean((v - mu) ** 2, axis=-1, keepdims=True)
        return (v - mu) / jnp.sqrt(var + EPS) * g + b

    def mha(q_in, k_in, v_in, wq, bq, wk, bk, wv, bv, wo, bo):
        q = q_in @ wq + bq
        k = k_in @ wk + bk
        v = v_in @ wv + bv
        bsz, sq, _ = q.shape
        sk = k.shape[1]
        qh = q.reshape(bsz, sq, H, DH).transpose(0, 2, 1, 3)
        kh = k.reshape(bsz, sk, H, DH).transpose(0, 2, 1, 3)
        vh = v.reshape(bsz, sk, H, DH).transpose(0, 2, 1, 3)
        s = jnp.einsum("bhqd,bhkd->bhqk", qh, kh) / math.sqrt(DH)
        p = jax.nn.softmax(s, axis=-1)
        o = jnp.einsum("bhqk,bhkd->bhqd", p, vh)
        o = o.transpose(0, 2, 1, 3).reshape(bsz, sq, D)
        return o @ wo + bo

    n1 = ln(x, ln1_g, ln1_b)
    x = x + mha(n1, n1, n1, wq1, bq1, wk1, bk1, wv1, bv1, wo1, bo1)
    n2x, n2e = ln(x, ln2_g, ln2_b), ln(enc, ln2_g, ln2_b)
    x = x + mha(n2x, n2e, n2e, wq2, bq2, wk2, bk2, wv2, bv2, wo2, bo2)
    n3 = ln(x, ln3_g, ln3_b)
    x = x + (jnp.maximum(n3 @ w_ff1 + b_ff1, 0.0) @ w_ff2 + b_ff2)
    return x


# ------------------------------- Main -----------------------------------------
if __name__ == "__main__":
    key = jax.random.PRNGKey(0)
    kx, ke, kp = jax.random.split(key, 3)
    x = jax.random.normal(kx, (B, S, D), jnp.float32)
    enc = jax.random.normal(ke, (B, S, D), jnp.float32)
    raw_params = init_params(kp)
    slab = pack_params(raw_params)

    out = decoder_layer(x, enc, slab)
    out = jax.block_until_ready(out)

    ref = ref_decoder_layer(x, enc, raw_params)
    assert out.shape == (B, S, D)
    # Tolerance accounts for the approximate (EUP) softmax reciprocal.
    assert jnp.allclose(out, ref, rtol=1e-3, atol=1e-4), "mismatch vs reference"
    print("KERNEL_OK")
</pallas_src>

<mosaic_0001>
module attributes {stable_mosaic.version = 11 : i64} {
  func.func @decoder_layer_kernel(%arg0: memref<32x32xf32, #tpu.memory_space<vmem>>, %arg1: memref<344x128xf32, #tpu.memory_space<vmem>>, %arg2: memref<16x32xf32, #tpu.memory_space<vmem>>) attributes {dimension_semantics = [], scalar_prefetch = 0 : i64, scratch_operands = 0 : i64, tpu.core_type = #tpu.core_type<tc>} {
    %c0 = arith.constant 0 : index
    %c0_0 = arith.constant 0 : index
    %0 = vector.load %arg0[%c0, %c0_0] : memref<32x32xf32, #tpu.memory_space<vmem>>, vector<16x32xf32>
    %c16 = arith.constant 16 : index
    %c0_1 = arith.constant 0 : index
    %1 = vector.load %arg0[%c16, %c0_1] : memref<32x32xf32, #tpu.memory_space<vmem>>, vector<16x32xf32>
    %c8 = arith.constant 8 : index
    %c0_2 = arith.constant 0 : index
    %2 = vector.load %arg1[%c8, %c0_2] : memref<344x128xf32, #tpu.memory_space<vmem>>, vector<64x16xf32>
    %c0_3 = arith.constant 0 : index
    %c0_4 = arith.constant 0 : index
    %3 = vector.load %arg1[%c0_3, %c0_4] : memref<344x128xf32, #tpu.memory_space<vmem>>, vector<1x32xf32>
    %c1 = arith.constant 1 : index
    %c0_5 = arith.constant 0 : index
    %4 = vector.load %arg1[%c1, %c0_5] : memref<344x128xf32, #tpu.memory_space<vmem>>, vector<1x32xf32>
    %cst = arith.constant dense<0.000000e+00> : vector<16xf32>
    %5 = vector.multi_reduction <add>, %0, %cst [1] : vector<16x32xf32> to vector<16xf32>
    %6 = vector.shape_cast %5 : vector<16xf32> to vector<16x1xf32>
    %cst_6 = arith.constant 3.200000e+01 : f32
    %7 = vector.broadcast %cst_6 : f32 to vector<16x1xf32>
    %8 = arith.divf %6, %7 : vector<16x1xf32>
    %9 = vector.broadcast %8 : vector<16x1xf32> to vector<16x32xf32>
    %10 = arith.subf %0, %9 : vector<16x32xf32>
    %11 = arith.mulf %10, %10 : vector<16x32xf32>
    %cst_7 = arith.constant dense<0.000000e+00> : vector<16xf32>
    %12 = vector.multi_reduction <add>, %11, %cst_7 [1] : vector<16x32xf32> to vector<16xf32>
    %13 = vector.shape_cast %12 : vector<16xf32> to vector<16x1xf32>
    %cst_8 = arith.constant 3.200000e+01 : f32
    %14 = vector.broadcast %cst_8 : f32 to vector<16x1xf32>
    %15 = arith.divf %13, %14 : vector<16x1xf32>
    %16 = vector.broadcast %8 : vector<16x1xf32> to vector<16x32xf32>
    %17 = arith.subf %0, %16 : vector<16x32xf32>
    %cst_9 = arith.constant 9.99999974E-6 : f32
    %18 = vector.broadcast %cst_9 : f32 to vector<16x1xf32>
    %19 = arith.addf %15, %18 : vector<16x1xf32>
    %20 = math.rsqrt %19 : vector<16x1xf32>
    %21 = vector.broadcast %20 : vector<16x1xf32> to vector<16x32xf32>
    %22 = arith.mulf %17, %21 : vector<16x32xf32>
    %23 = vector.broadcast %3 : vector<1x32xf32> to vector<16x32xf32>
    %24 = arith.mulf %22, %23 : vector<16x32xf32>
    %25 = vector.broadcast %4 : vector<1x32xf32> to vector<16x32xf32>
    %26 = arith.addf %24, %25 : vector<16x32xf32>
    %c72 = arith.constant 72 : index
    %c0_10 = arith.constant 0 : index
    %27 = vector.load %arg1[%c72, %c0_10] : memref<344x128xf32, #tpu.memory_space<vmem>>, vector<32x96xf32>
    %cst_11 = arith.constant dense<0.000000e+00> : vector<16x96xf32>
    %28 = tpu.matmul %26, %27, %cst_11 {dimension_numbers = #tpu.dot_dimension_numbers<[1], [0], [0], [1], [0, 0, 1, 1], [], []>} : vector<16x32xf32>, vector<32x96xf32>, vector<16x96xf32> -> vector<16x96xf32>
    %c104 = arith.constant 104 : index
    %c0_12 = arith.constant 0 : index
    %29 = vector.load %arg1[%c104, %c0_12] : memref<344x128xf32, #tpu.memory_space<vmem>>, vector<1x96xf32>
    %30 = vector.broadcast %29 : vector<1x96xf32> to vector<16x96xf32>
    %31 = arith.addf %28, %30 : vector<16x96xf32>
    %32 = vector.extract_strided_slice %31 {offsets = [0, 0], sizes = [16, 32], strides = [1, 1]} : vector<16x96xf32> to vector<16x32xf32>
    %33 = vector.extract_strided_slice %31 {offsets = [0, 32], sizes = [16, 32], strides = [1, 1]} : vector<16x96xf32> to vector<16x32xf32>
    %34 = vector.extract_strided_slice %31 {offsets = [0, 64], sizes = [16, 32], strides = [1, 1]} : vector<16x96xf32> to vector<16x32xf32>
    %c112 = arith.constant 112 : index
    %c0_13 = arith.constant 0 : index
    %35 = vector.load %arg1[%c112, %c0_13] : memref<344x128xf32, #tpu.memory_space<vmem>>, vector<32x32xf32>
    %c144 = arith.constant 144 : index
    %c0_14 = arith.constant 0 : index
    %36 = vector.load %arg1[%c144, %c0_14] : memref<344x128xf32, #tpu.memory_space<vmem>>, vector<1x32xf32>
    %37 = vector.extract_strided_slice %32 {offsets = [0, 0], sizes = [16, 8], strides = [1, 1]} : vector<16x32xf32> to vector<16x8xf32>
    %38 = vector.extract_strided_slice %33 {offsets = [0, 0], sizes = [16, 8], strides = [1, 1]} : vector<16x32xf32> to vector<16x8xf32>
    %cst_15 = arith.constant dense<0.000000e+00> : vector<16x16xf32>
    %39 = tpu.matmul %37, %38, %cst_15 {dimension_numbers = #tpu.dot_dimension_numbers<[1], [1], [0], [0], [0, 0, 1, 0], [], []>} : vector<16x8xf32>, vector<16x8xf32>, vector<16x16xf32> -> vector<16x16xf32>
    %40 = vector.extract_strided_slice %32 {offsets = [0, 8], sizes = [16, 8], strides = [1, 1]} : vector<16x32xf32> to vector<16x8xf32>
    %41 = vector.extract_strided_slice %33 {offsets = [0, 8], sizes = [16, 8], strides = [1, 1]} : vector<16x32xf32> to vector<16x8xf32>
    %cst_16 = arith.constant dense<0.000000e+00> : vector<16x16xf32>
    %42 = tpu.matmul %40, %41, %cst_16 {dimension_numbers = #tpu.dot_dimension_numbers<[1], [1], [0], [0], [0, 0, 1, 0], [], []>} : vector<16x8xf32>, vector<16x8xf32>, vector<16x16xf32> -> vector<16x16xf32>
    %43 = vector.extract_strided_slice %32 {offsets = [0, 16], sizes = [16, 8], strides = [1, 1]} : vector<16x32xf32> to vector<16x8xf32>
    %44 = vector.extract_strided_slice %33 {offsets = [0, 16], sizes = [16, 8], strides = [1, 1]} : vector<16x32xf32> to vector<16x8xf32>
    %cst_17 = arith.constant dense<0.000000e+00> : vector<16x16xf32>
    %45 = tpu.matmul %43, %44, %cst_17 {dimension_numbers = #tpu.dot_dimension_numbers<[1], [1], [0], [0], [0, 0, 1, 0], [], []>} : vector<16x8xf32>, vector<16x8xf32>, vector<16x16xf32> -> vector<16x16xf32>
    %46 = vector.extract_strided_slice %32 {offsets = [0, 24], sizes = [16, 8], strides = [1, 1]} : vector<16x32xf32> to vector<16x8xf32>
    %47 = vector.extract_strided_slice %33 {offsets = [0, 24], sizes = [16, 8], strides = [1, 1]} : vector<16x32xf32> to vector<16x8xf32>
    %cst_18 = arith.constant dense<0.000000e+00> : vector<16x16xf32>
    %48 = tpu.matmul %46, %47, %cst_18 {dimension_numbers = #tpu.dot_dimension_numbers<[1], [1], [0], [0], [0, 0, 1, 0], [], []>} : vector<16x8xf32>, vector<16x8xf32>, vector<16x16xf32> -> vector<16x16xf32>
    %49 = tpu.concatenate %39, %42, %45, %48 in 0 : vector<16x16xf32>, vector<16x16xf32>, vector<16x16xf32>, vector<16x16xf32> -> vector<64x16xf32>
    %50 = arith.addf %49, %2 : vector<64x16xf32>
    %cst_19 = arith.constant dense<0xFF800000> : vector<64xf32>
    %51 = vector.multi_reduction <maximumf>, %50, %cst_19 [1] : vector<64x16xf32> to vector<64xf32>
    %52 = vector.shape_cast %51 : vector<64xf32> to vector<64x1xf32>
    %53 = vector.broadcast %52 : vector<64x1xf32> to vector<64x16xf32>
    %54 = arith.subf %50, %53 : vector<64x16xf32>
    %55 = math.exp %54 : vector<64x16xf32>
    %cst_20 = arith.constant dense<0.000000e+00> : vector<64xf32>
    %56 = vector.multi_reduction <add>, %55, %cst_20 [1] : vector<64x16xf32> to vector<64xf32>
    %57 = vector.shape_cast %56 : vector<64xf32> to vector<64x1xf32>
    %58 = tpu.reciprocal %57 {approx = true} : vector<64x1xf32> -> vector<64x1xf32>
    %59 = vector.broadcast %58 : vector<64x1xf32> to vector<64x16xf32>
    %60 = arith.mulf %55, %59 : vector<64x16xf32>
    %61 = vector.extract_strided_slice %60 {offsets = [0, 0], sizes = [16, 16], strides = [1, 1]} : vector<64x16xf32> to vector<16x16xf32>
    %62 = vector.extract_strided_slice %34 {offsets = [0, 0], sizes = [16, 8], strides = [1, 1]} : vector<16x32xf32> to vector<16x8xf32>
    %cst_21 = arith.constant dense<0.000000e+00> : vector<16x8xf32>
    %63 = tpu.matmul %61, %62, %cst_21 {dimension_numbers = #tpu.dot_dimension_numbers<[1], [0], [0], [1], [0, 0, 1, 1], [], []>} : vector<16x16xf32>, vector<16x8xf32>, vector<16x8xf32> -> vector<16x8xf32>
    %64 = vector.extract_strided_slice %60 {offsets = [16, 0], sizes = [16, 16], strides = [1, 1]} : vector<64x16xf32> to vector<16x16xf32>
    %65 = vector.extract_strided_slice %34 {offsets = [0, 8], sizes = [16, 8], strides = [1, 1]} : vector<16x32xf32> to vector<16x8xf32>
    %cst_22 = arith.constant dense<0.000000e+00> : vector<16x8xf32>
    %66 = tpu.matmul %64, %65, %cst_22 {dimension_numbers = #tpu.dot_dimension_numbers<[1], [0], [0], [1], [0, 0, 1, 1], [], []>} : vector<16x16xf32>, vector<16x8xf32>, vector<16x8xf32> -> vector<16x8xf32>
    %67 = vector.extract_strided_slice %60 {offsets = [32, 0], sizes = [16, 16], strides = [1, 1]} : vector<64x16xf32> to vector<16x16xf32>
    %68 = vector.extract_strided_slice %34 {offsets = [0, 16], sizes = [16, 8], strides = [1, 1]} : vector<16x32xf32> to vector<16x8xf32>
    %cst_23 = arith.constant dense<0.000000e+00> : vector<16x8xf32>
    %69 = tpu.matmul %67, %68, %cst_23 {dimension_numbers = #tpu.dot_dimension_numbers<[1], [0], [0], [1], [0, 0, 1, 1], [], []>} : vector<16x16xf32>, vector<16x8xf32>, vector<16x8xf32> -> vector<16x8xf32>
    %70 = vector.extract_strided_slice %60 {offsets = [48, 0], sizes = [16, 16], strides = [1, 1]} : vector<64x16xf32> to vector<16x16xf32>
    %71 = vector.extract_strided_slice %34 {offsets = [0, 24], sizes = [16, 8], strides = [1, 1]} : vector<16x32xf32> to vector<16x8xf32>
    %cst_24 = arith.constant dense<0.000000e+00> : vector<16x8xf32>
    %72 = tpu.matmul %70, %71, %cst_24 {dimension_numbers = #tpu.dot_dimension_numbers<[1], [0], [0], [1], [0, 0, 1, 1], [], []>} : vector<16x16xf32>, vector<16x8xf32>, vector<16x8xf32> -> vector<16x8xf32>
    %73 = tpu.concatenate %63, %66, %69, %72 in 1 : vector<16x8xf32>, vector<16x8xf32>, vector<16x8xf32>, vector<16x8xf32> -> vector<16x32xf32>
    %cst_25 = arith.constant dense<0.000000e+00> : vector<16x32xf32>
    %74 = tpu.matmul %73, %35, %cst_25 {dimension_numbers = #tpu.dot_dimension_numbers<[1], [0], [0], [1], [0, 0, 1, 1], [], []>} : vector<16x32xf32>, vector<32x32xf32>, vector<16x32xf32> -> vector<16x32xf32>
    %75 = vector.broadcast %36 : vector<1x32xf32> to vector<16x32xf32>
    %76 = arith.addf %74, %75 : vector<16x32xf32>
    %77 = arith.addf %0, %76 : vector<16x32xf32>
    %78 = tpu.concatenate %77, %1 in 0 : vector<16x32xf32>, vector<16x32xf32> -> vector<32x32xf32>
    %c2 = arith.constant 2 : index
    %c0_26 = arith.constant 0 : index
    %79 = vector.load %arg1[%c2, %c0_26] : memref<344x128xf32, #tpu.memory_space<vmem>>, vector<1x32xf32>
    %c3 = arith.constant 3 : index
    %c0_27 = arith.constant 0 : index
    %80 = vector.load %arg1[%c3, %c0_27] : memref<344x128xf32, #tpu.memory_space<vmem>>, vector<1x32xf32>
    %cst_28 = arith.constant dense<0.000000e+00> : vector<32xf32>
    %81 = vector.multi_reduction <add>, %78, %cst_28 [1] : vector<32x32xf32> to vector<32xf32>
    %82 = vector.shape_cast %81 : vector<32xf32> to vector<32x1xf32>
    %cst_29 = arith.constant 3.200000e+01 : f32
    %83 = vector.broadcast %cst_29 : f32 to vector<32x1xf32>
    %84 = arith.divf %82, %83 : vector<32x1xf32>
    %85 = vector.broadcast %84 : vector<32x1xf32> to vector<32x32xf32>
    %86 = arith.subf %78, %85 : vector<32x32xf32>
    %87 = arith.mulf %86, %86 : vector<32x32xf32>
    %cst_30 = arith.constant dense<0.000000e+00> : vector<32xf32>
    %88 = vector.multi_reduction <add>, %87, %cst_30 [1] : vector<32x32xf32> to vector<32xf32>
    %89 = vector.shape_cast %88 : vector<32xf32> to vector<32x1xf32>
    %cst_31 = arith.constant 3.200000e+01 : f32
    %90 = vector.broadcast %cst_31 : f32 to vector<32x1xf32>
    %91 = arith.divf %89, %90 : vector<32x1xf32>
    %92 = vector.broadcast %84 : vector<32x1xf32> to vector<32x32xf32>
    %93 = arith.subf %78, %92 : vector<32x32xf32>
    %cst_32 = arith.constant 9.99999974E-6 : f32
    %94 = vector.broadcast %cst_32 : f32 to vector<32x1xf32>
    %95 = arith.addf %91, %94 : vector<32x1xf32>
    %96 = math.rsqrt %95 : vector<32x1xf32>
    %97 = vector.broadcast %96 : vector<32x1xf32> to vector<32x32xf32>
    %98 = arith.mulf %93, %97 : vector<32x32xf32>
    %99 = vector.broadcast %79 : vector<1x32xf32> to vector<32x32xf32>
    %100 = arith.mulf %98, %99 : vector<32x32xf32>
    %101 = vector.broadcast %80 : vector<1x32xf32> to vector<32x32xf32>
    %102 = arith.addf %100, %101 : vector<32x32xf32>
    %c152 = arith.constant 152 : index
    %c0_33 = arith.constant 0 : index
    %103 = vector.load %arg1[%c152, %c0_33] : memref<344x128xf32, #tpu.memory_space<vmem>>, vector<32x96xf32>
    %cst_34 = arith.constant dense<0.000000e+00> : vector<32x96xf32>
    %104 = tpu.matmul %102, %103, %cst_34 {dimension_numbers = #tpu.dot_dimension_numbers<[1], [0], [0], [1], [0, 0, 1, 1], [], []>} : vector<32x32xf32>, vector<32x96xf32>, vector<32x96xf32> -> vector<32x96xf32>
    %c184 = arith.constant 184 : index
    %c0_35 = arith.constant 0 : index
    %105 = vector.load %arg1[%c184, %c0_35] : memref<344x128xf32, #tpu.memory_space<vmem>>, vector<1x96xf32>
    %106 = vector.broadcast %105 : vector<1x96xf32> to vector<32x96xf32>
    %107 = arith.addf %104, %106 : vector<32x96xf32>
    %108 = vector.extract_strided_slice %107 {offsets = [0, 0], sizes = [16, 32], strides = [1, 1]} : vector<32x96xf32> to vector<16x32xf32>
    %109 = vector.extract_strided_slice %107 {offsets = [16, 32], sizes = [16, 32], strides = [1, 1]} : vector<32x96xf32> to vector<16x32xf32>
    %110 = vector.extract_strided_slice %107 {offsets = [16, 64], sizes = [16, 32], strides = [1, 1]} : vector<32x96xf32> to vector<16x32xf32>
    %c192 = arith.constant 192 : index
    %c0_36 = arith.constant 0 : index
    %111 = vector.load %arg1[%c192, %c0_36] : memref<344x128xf32, #tpu.memory_space<vmem>>, vector<32x32xf32>
    %c224 = arith.constant 224 : index
    %c0_37 = arith.constant 0 : index
    %112 = vector.load %arg1[%c224, %c0_37] : memref<344x128xf32, #tpu.memory_space<vmem>>, vector<1x32xf32>
    %113 = vector.extract_strided_slice %108 {offsets = [0, 0], sizes = [16, 8], strides = [1, 1]} : vector<16x32xf32> to vector<16x8xf32>
    %114 = vector.extract_strided_slice %109 {offsets = [0, 0], sizes = [16, 8], strides = [1, 1]} : vector<16x32xf32> to vector<16x8xf32>
    %cst_38 = arith.constant dense<0.000000e+00> : vector<16x16xf32>
    %115 = tpu.matmul %113, %114, %cst_38 {dimension_numbers = #tpu.dot_dimension_numbers<[1], [1], [0], [0], [0, 0, 1, 0], [], []>} : vector<16x8xf32>, vector<16x8xf32>, vector<16x16xf32> -> vector<16x16xf32>
    %116 = vector.extract_strided_slice %108 {offsets = [0, 8], sizes = [16, 8], strides = [1, 1]} : vector<16x32xf32> to vector<16x8xf32>
    %117 = vector.extract_strided_slice %109 {offsets = [0, 8], sizes = [16, 8], strides = [1, 1]} : vector<16x32xf32> to vector<16x8xf32>
    %cst_39 = arith.constant dense<0.000000e+00> : vector<16x16xf32>
    %118 = tpu.matmul %116, %117, %cst_39 {dimension_numbers = #tpu.dot_dimension_numbers<[1], [1], [0], [0], [0, 0, 1, 0], [], []>} : vector<16x8xf32>, vector<16x8xf32>, vector<16x16xf32> -> vector<16x16xf32>
    %119 = vector.extract_strided_slice %108 {offsets = [0, 16], sizes = [16, 8], strides = [1, 1]} : vector<16x32xf32> to vector<16x8xf32>
    %120 = vector.extract_strided_slice %109 {offsets = [0, 16], sizes = [16, 8], strides = [1, 1]} : vector<16x32xf32> to vector<16x8xf32>
    %cst_40 = arith.constant dense<0.000000e+00> : vector<16x16xf32>
    %121 = tpu.matmul %119, %120, %cst_40 {dimension_numbers = #tpu.dot_dimension_numbers<[1], [1], [0], [0], [0, 0, 1, 0], [], []>} : vector<16x8xf32>, vector<16x8xf32>, vector<16x16xf32> -> vector<16x16xf32>
    %122 = vector.extract_strided_slice %108 {offsets = [0, 24], sizes = [16, 8], strides = [1, 1]} : vector<16x32xf32> to vector<16x8xf32>
    %123 = vector.extract_strided_slice %109 {offsets = [0, 24], sizes = [16, 8], strides = [1, 1]} : vector<16x32xf32> to vector<16x8xf32>
    %cst_41 = arith.constant dense<0.000000e+00> : vector<16x16xf32>
    %124 = tpu.matmul %122, %123, %cst_41 {dimension_numbers = #tpu.dot_dimension_numbers<[1], [1], [0], [0], [0, 0, 1, 0], [], []>} : vector<16x8xf32>, vector<16x8xf32>, vector<16x16xf32> -> vector<16x16xf32>
    %125 = tpu.concatenate %115, %118, %121, %124 in 0 : vector<16x16xf32>, vector<16x16xf32>, vector<16x16xf32>, vector<16x16xf32> -> vector<64x16xf32>
    %126 = arith.addf %125, %2 : vector<64x16xf32>
    %cst_42 = arith.constant dense<0xFF800000> : vector<64xf32>
    %127 = vector.multi_reduction <maximumf>, %126, %cst_42 [1] : vector<64x16xf32> to vector<64xf32>
    %128 = vector.shape_cast %127 : vector<64xf32> to vector<64x1xf32>
    %129 = vector.broadcast %128 : vector<64x1xf32> to vector<64x16xf32>
    %130 = arith.subf %126, %129 : vector<64x16xf32>
    %131 = math.exp %130 : vector<64x16xf32>
    %cst_43 = arith.constant dense<0.000000e+00> : vector<64xf32>
    %132 = vector.multi_reduction <add>, %131, %cst_43 [1] : vector<64x16xf32> to vector<64xf32>
    %133 = vector.shape_cast %132 : vector<64xf32> to vector<64x1xf32>
    %134 = tpu.reciprocal %133 {approx = true} : vector<64x1xf32> -> vector<64x1xf32>
    %135 = vector.broadcast %134 : vector<64x1xf32> to vector<64x16xf32>
    %136 = arith.mulf %131, %135 : vector<64x16xf32>
    %137 = vector.extract_strided_slice %136 {offsets = [0, 0], sizes = [16, 16], strides = [1, 1]} : vector<64x16xf32> to vector<16x16xf32>
    %138 = vector.extract_strided_slice %110 {offsets = [0, 0], sizes = [16, 8], strides = [1, 1]} : vector<16x32xf32> to vector<16x8xf32>
    %cst_44 = arith.constant dense<0.000000e+00> : vector<16x8xf32>
    %139 = tpu.matmul %137, %138, %cst_44 {dimension_numbers = #tpu.dot_dimension_numbers<[1], [0], [0], [1], [0, 0, 1, 1], [], []>} : vector<16x16xf32>, vector<16x8xf32>, vector<16x8xf32> -> vector<16x8xf32>
    %140 = vector.extract_strided_slice %136 {offsets = [16, 0], sizes = [16, 16], strides = [1, 1]} : vector<64x16xf32> to vector<16x16xf32>
    %141 = vector.extract_strided_slice %110 {offsets = [0, 8], sizes = [16, 8], strides = [1, 1]} : vector<16x32xf32> to vector<16x8xf32>
    %cst_45 = arith.constant dense<0.000000e+00> : vector<16x8xf32>
    %142 = tpu.matmul %140, %141, %cst_45 {dimension_numbers = #tpu.dot_dimension_numbers<[1], [0], [0], [1], [0, 0, 1, 1], [], []>} : vector<16x16xf32>, vector<16x8xf32>, vector<16x8xf32> -> vector<16x8xf32>
    %143 = vector.extract_strided_slice %136 {offsets = [32, 0], sizes = [16, 16], strides = [1, 1]} : vector<64x16xf32> to vector<16x16xf32>
    %144 = vector.extract_strided_slice %110 {offsets = [0, 16], sizes = [16, 8], strides = [1, 1]} : vector<16x32xf32> to vector<16x8xf32>
    %cst_46 = arith.constant dense<0.000000e+00> : vector<16x8xf32>
    %145 = tpu.matmul %143, %144, %cst_46 {dimension_numbers = #tpu.dot_dimension_numbers<[1], [0], [0], [1], [0, 0, 1, 1], [], []>} : vector<16x16xf32>, vector<16x8xf32>, vector<16x8xf32> -> vector<16x8xf32>
    %146 = vector.extract_strided_slice %136 {offsets = [48, 0], sizes = [16, 16], strides = [1, 1]} : vector<64x16xf32> to vector<16x16xf32>
    %147 = vector.extract_strided_slice %110 {offsets = [0, 24], sizes = [16, 8], strides = [1, 1]} : vector<16x32xf32> to vector<16x8xf32>
    %cst_47 = arith.constant dense<0.000000e+00> : vector<16x8xf32>
    %148 = tpu.matmul %146, %147, %cst_47 {dimension_numbers = #tpu.dot_dimension_numbers<[1], [0], [0], [1], [0, 0, 1, 1], [], []>} : vector<16x16xf32>, vector<16x8xf32>, vector<16x8xf32> -> vector<16x8xf32>
    %149 = tpu.concatenate %139, %142, %145, %148 in 1 : vector<16x8xf32>, vector<16x8xf32>, vector<16x8xf32>, vector<16x8xf32> -> vector<16x32xf32>
    %cst_48 = arith.constant dense<0.000000e+00> : vector<16x32xf32>
    %150 = tpu.matmul %149, %111, %cst_48 {dimension_numbers = #tpu.dot_dimension_numbers<[1], [0], [0], [1], [0, 0, 1, 1], [], []>} : vector<16x32xf32>, vector<32x32xf32>, vector<16x32xf32> -> vector<16x32xf32>
    %151 = vector.broadcast %112 : vector<1x32xf32> to vector<16x32xf32>
    %152 = arith.addf %150, %151 : vector<16x32xf32>
    %153 = arith.addf %77, %152 : vector<16x32xf32>
    %c4 = arith.constant 4 : index
    %c0_49 = arith.constant 0 : index
    %154 = vector.load %arg1[%c4, %c0_49] : memref<344x128xf32, #tpu.memory_space<vmem>>, vector<1x32xf32>
    %c5 = arith.constant 5 : index
    %c0_50 = arith.constant 0 : index
    %155 = vector.load %arg1[%c5, %c0_50] : memref<344x128xf32, #tpu.memory_space<vmem>>, vector<1x32xf32>
    %cst_51 = arith.constant dense<0.000000e+00> : vector<16xf32>
    %156 = vector.multi_reduction <add>, %153, %cst_51 [1] : vector<16x32xf32> to vector<16xf32>
    %157 = vector.shape_cast %156 : vector<16xf32> to vector<16x1xf32>
    %cst_52 = arith.constant 3.200000e+01 : f32
    %158 = vector.broadcast %cst_52 : f32 to vector<16x1xf32>
    %159 = arith.divf %157, %158 : vector<16x1xf32>
    %160 = vector.broadcast %159 : vector<16x1xf32> to vector<16x32xf32>
    %161 = arith.subf %153, %160 : vector<16x32xf32>
    %162 = arith.mulf %161, %161 : vector<16x32xf32>
    %cst_53 = arith.constant dense<0.000000e+00> : vector<16xf32>
    %163 = vector.multi_reduction <add>, %162, %cst_53 [1] : vector<16x32xf32> to vector<16xf32>
    %164 = vector.shape_cast %163 : vector<16xf32> to vector<16x1xf32>
    %cst_54 = arith.constant 3.200000e+01 : f32
    %165 = vector.broadcast %cst_54 : f32 to vector<16x1xf32>
    %166 = arith.divf %164, %165 : vector<16x1xf32>
    %167 = vector.broadcast %159 : vector<16x1xf32> to vector<16x32xf32>
    %168 = arith.subf %153, %167 : vector<16x32xf32>
    %cst_55 = arith.constant 9.99999974E-6 : f32
    %169 = vector.broadcast %cst_55 : f32 to vector<16x1xf32>
    %170 = arith.addf %166, %169 : vector<16x1xf32>
    %171 = math.rsqrt %170 : vector<16x1xf32>
    %172 = vector.broadcast %171 : vector<16x1xf32> to vector<16x32xf32>
    %173 = arith.mulf %168, %172 : vector<16x32xf32>
    %174 = vector.broadcast %154 : vector<1x32xf32> to vector<16x32xf32>
    %175 = arith.mulf %173, %174 : vector<16x32xf32>
    %176 = vector.broadcast %155 : vector<1x32xf32> to vector<16x32xf32>
    %177 = arith.addf %175, %176 : vector<16x32xf32>
    %c232 = arith.constant 232 : index
    %c0_56 = arith.constant 0 : index
    %178 = vector.load %arg1[%c232, %c0_56] : memref<344x128xf32, #tpu.memory_space<vmem>>, vector<32x64xf32>
    %cst_57 = arith.constant dense<0.000000e+00> : vector<16x64xf32>
    %179 = tpu.matmul %177, %178, %cst_57 {dimension_numbers = #tpu.dot_dimension_numbers<[1], [0], [0], [1], [0, 0, 1, 1], [], []>} : vector<16x32xf32>, vector<32x64xf32>, vector<16x64xf32> -> vector<16x64xf32>
    %c264 = arith.constant 264 : index
    %c0_58 = arith.constant 0 : index
    %180 = vector.load %arg1[%c264, %c0_58] : memref<344x128xf32, #tpu.memory_space<vmem>>, vector<1x64xf32>
    %181 = vector.broadcast %180 : vector<1x64xf32> to vector<16x64xf32>
    %182 = arith.addf %179, %181 : vector<16x64xf32>
    %cst_59 = arith.constant 0.000000e+00 : f32
    %183 = vector.broadcast %cst_59 : f32 to vector<16x64xf32>
    %184 = arith.maximumf %182, %183 : vector<16x64xf32>
    %c272 = arith.constant 272 : index
    %c0_60 = arith.constant 0 : index
    %185 = vector.load %arg1[%c272, %c0_60] : memref<344x128xf32, #tpu.memory_space<vmem>>, vector<64x32xf32>
    %cst_61 = arith.constant dense<0.000000e+00> : vector<16x32xf32>
    %186 = tpu.matmul %184, %185, %cst_61 {dimension_numbers = #tpu.dot_dimension_numbers<[1], [0], [0], [1], [0, 0, 1, 1], [], []>} : vector<16x64xf32>, vector<64x32xf32>, vector<16x32xf32> -> vector<16x32xf32>
    %c336 = arith.constant 336 : index
    %c0_62 = arith.constant 0 : index
    %187 = vector.load %arg1[%c336, %c0_62] : memref<344x128xf32, #tpu.memory_space<vmem>>, vector<1x32xf32>
    %188 = vector.broadcast %187 : vector<1x32xf32> to vector<16x32xf32>
    %189 = arith.addf %186, %188 : vector<16x32xf32>
    %190 = arith.addf %153, %189 : vector<16x32xf32>
    %c0_63 = arith.constant 0 : index
    %c0_64 = arith.constant 0 : index
    %191 = vector.load %arg2[%c0_63, %c0_64] : memref<16x32xf32, #tpu.memory_space<vmem>>, vector<16x32xf32>
    tpu.vector_store %arg2[%c0_63, %c0_64], %190 {strides = array<i32>} : memref<16x32xf32, #tpu.memory_space<vmem>>, vector<16x32xf32>,
    return
  }
}

</mosaic_0001>

<llo_original>
// kernel: decoder_layer.1
$region0: #{decoder_layer.1}
  #allocation0 [shape = 'u32[]', space=smem, size = 0x4, offset = 0x4, fixed_abs, tag = 'smem constant byte address 0x4 - core index']
  #allocation1 [shape = 'u32[144,128]{1,0:T(1,128)}', space=vmem, size = 0x12000, scoped, tag = 'internal scratch']
  %s0 = inlined_call_operand.vmem [shape: f32[32,32], index: 0, kind: input, shape index: {}]
  %s1 = inlined_call_operand.hbm [shape: f32[344,128], index: 1, kind: input, shape index: {}]
  %s2 = inlined_call_operand.hbm [shape: f32[16,32], index: 2, kind: output, shape index: {}]
  %s3 = sld [smem:[#allocation0]]
  $region22: #{decoder_layer.1} parent=0
    _
  %s5 = ssub.s32 1, %s3
  %s6 = scalar_select 0, %s5, %s3
  $region1: #{decoder_layer.1} parent=0
    #allocation2 [shape = 'u8[176128]{0}', space=vmem, size = 0x2b000, scoped, tag = 'input window, operand 1, single buffered']
    #allocation3 [shape = 's32[1]{0}', space=sflag, size = 0x4, scoped, tag = 'scoped memory for decoder_layer.1']
    #allocation4 [shape = 's32[1]{0}', space=sflag, size = 0x4, scoped, tag = 'scoped memory for decoder_layer.1']
    #allocation5 [shape = 'u8[8192]{0}', space=vmem, size = 0x2000, scoped, tag = 'output window, operand 0, single buffered']
    %7 = vsyncpa [#allocation3], 0
    %8 = vsyncpa [#allocation4], 0
    // Predicated region
    $region2: #{decoder_layer.1} parent=1 // pred_check
      _
    $region3: #{decoder_layer.1} parent=1 // pred_check_branch
      %10 = sbr.rel (0) target = $region5
    $region4: #{decoder_layer.1} parent=1 // pred_region
      _
    $region5: #{decoder_layer.1} parent=1 // pred_fallthru
      _
    // Predicated region
    $region6: #{decoder_layer.1} parent=1 // pred_check
      _
    $region7: #{decoder_layer.1} parent=1 // pred_check_branch
      %12 = sbr.rel (0) target = $region9
    $region8: #{decoder_layer.1} parent=1 // pred_region
      %s14 = ssub.s32 5504, 5504
      %15 = vsyncadd [#allocation3], %s14
      %s16 = sshll.u32 [#allocation2], 4
      %s17 = int_to_ptr.vmem [resolvable:$true] %s16
      %22 = dma.hbm_to_vmem [thread:$0]  %s1, 5504, %s17, [#allocation3], 128, 128, 8
    $region9: #{decoder_layer.1} parent=1 // pred_fallthru
      _
    // Predicated region
    $region10: #{decoder_layer.1} parent=1 // pred_check
      _
    $region11: #{decoder_layer.1} parent=1 // pred_check_branch
      %24 = sbr.rel (0) target = $region13
    $region12: #{decoder_layer.1} parent=1 // pred_region
      %25 = dma.done [#allocation3], 5504
    $region13: #{decoder_layer.1} parent=1 // pred_fallthru
      _
    %v26 = vld [vmem:[%s0] sm:$0xff]
    %v27 = vld [vmem:[%s0 + $0x8] sm:$0xff]
    %v28 = vld [vmem:[%s0 + $0x10] sm:$0xff]
    %v29 = vld [vmem:[%s0 + $0x18] sm:$0xff]
    %v30 = vld [vmem:[#allocation2 + $0x8] sm:$0xff]
    %v31 = vld [vmem:[#allocation2 + $0x10] sm:$0xff]
    %v32 = vld [vmem:[#allocation2 + $0x18] sm:$0xff]
    %v33 = vld [vmem:[#allocation2 + $0x20] sm:$0xff]
    %v34 = vld [vmem:[#allocation2 + $0x28] sm:$0xff]
    %v35 = vld [vmem:[#allocation2 + $0x30] sm:$0xff]
    %v36 = vld [vmem:[#allocation2 + $0x38] sm:$0xff]
    %v37 = vld [vmem:[#allocation2 + $0x40] sm:$0xff]
    %v38 = vld [vmem:[#allocation2] sm:$0x1]
    %v39 = vld [vmem:[#allocation2 + $0x1] sm:$0x1]
    %vm40 = vcmask 261120
    %v41 = vsel %vm40, %v26, 0.0
    %42 = vadd.xlane.f32.xlu0 %v41
    %v43 = vpop.xlane.xlu0 %42
    %v44 = vsel %vm40, %v27, 0.0
    %45 = vadd.xlane.f32.xlu0 %v44
    %v46 = vpop.xlane.xlu0 %45
    %v47 = vrcp.pop 32.0
    %v48 = vmul.f32 %v43, %v47
    %v49 = vmul.f32 %v46, %v47
    %v50 = vsub.f32 %v26, %v48
    %v51 = vsub.f32 %v27, %v49
    %v52 = vmul.f32 %v50, %v50
    %v53 = vmul.f32 %v51, %v51
    %v54 = vsel %vm40, %v52, 0.0
    %55 = vadd.xlane.f32.xlu0 %v54
    %v56 = vpop.xlane.xlu0 %55
    %v57 = vsel %vm40, %v53, 0.0
    %58 = vadd.xlane.f32.xlu0 %v57
    %v59 = vpop.xlane.xlu0 %58
    %v60 = vmul.f32 %v56, %v47
    %v61 = vmul.f32 %v59, %v47
    %v62 = vadd.f32 %v60, 1e-05
    %v63 = vadd.f32 %v61, 1e-05
    %v64 = vrsqrt.pop %v62
    %v65 = vrsqrt.pop %v63
    %v66 = vmul.f32 %v50, %v64
    %v67 = vmul.f32 %v51, %v65
    %v68 = vlaneseq
    %v69 = vshrl.u32 %v68, 7
    %v70 = vsub.s32 0, %v69
    %v71 = vrot.slane %v38, %v70
    %v72 = vmul.f32 %v66, %v71
    %v73 = vmul.f32 %v67, %v71
    %v74 = vlaneseq
    %v75 = vshrl.u32 %v74, 7
    %v76 = vsub.s32 0, %v75
    %v77 = vrot.slane %v39, %v76
    %v78 = vadd.f32 %v72, %v77
    %v79 = vadd.f32 %v73, %v77
    %v80 = vld [vmem:[#allocation2 + $0x48] sm:$0xff]
    %v81 = vld [vmem:[#allocation2 + $0x50] sm:$0xff]
    %v82 = vld [vmem:[#allocation2 + $0x58] sm:$0xff]
    %v83 = vld [vmem:[#allocation2 + $0x60] sm:$0xff]
    %v84 = vld [vmem:[#allocation2 + $0x68] sm:$0x1]
    %v85 = vlaneseq
    %v86 = vshrl.u32 %v85, 7
    %v87 = vsub.s32 0, %v86
    %v88 = vrot.slane %v84, %v87
    %v90 = vsel %vm40, %v78, 0
    %v93 = vsel %vm40, %v79, 0
    %95 = vmatprep.subr.mxu0 0.0
    %96 = vmatpush1.msra.mxu0 %v80
    %97 = vmatprep.subr.mxu0 0.0
    %98 = vmatpush1.msra.mxu0 %v81
    %99 = vmatprep.subr.mxu0 0.0
    %100 = vmatpush1.msra.mxu0 %v82
    %101 = vmatprep.subr.mxu0 0.0
    %102 = vmatpush1.msra.mxu0 %v83
    %103 = vmatprep.subr.mxu0 0.0
    %104 = vmatpush1.msra.mxu0 0.0
    %105 = vmatprep.subr.mxu0 0.0
    %106 = vmatpush1.msra.mxu0 0.0
    %107 = vmatprep.subr.mxu0 0.0
    %108 = vmatpush1.msra.mxu0 0.0
    %109 = vmatprep.subr.mxu0 0.0
    %110 = vmatpush1.msra.mxu0 0.0
    %111 = vmatprep.subr.mxu0 0.0
    %112 = vmatpush1.msra.mxu0 0.0
    %113 = vmatprep.subr.mxu0 0.0
    %114 = vmatpush1.msra.mxu0 0.0
    %115 = vmatprep.subr.mxu0 0.0
    %116 = vmatpush1.msra.mxu0 0.0
    %117 = vmatprep.subr.mxu0 0.0
    %118 = vmatpush1.msra.mxu0 0.0
    %119 = vmatprep.subr.mxu0 0.0
    %120 = vmatpush1.msra.mxu0 0.0
    %121 = vmatprep.subr.mxu0 0.0
    %122 = vmatpush1.msra.mxu0 0.0
    %123 = vmatprep.subr.mxu0 0.0
    %124 = vmatpush1.msra.mxu0 0.0
    %125 = vmatprep.subr.mxu0 0.0
    %126 = vmatpush1.msra.mxu0 0.0
    %127 = vmatprep.subr.mxu0 0.0
    %128 = vmatpush1.msra.mxu0 0.0
    %129 = vmatprep.subr.mxu0 0.0
    %130 = vmatpush1.msra.mxu0 0.0
    %131 = vmatprep.subr.mxu0 0.0
    %132 = vmatpush1.msra.mxu0 0.0
    %133 = vmatprep.subr.mxu0 0.0
    %134 = vmatpush1.msra.mxu0 0.0
    %135 = vmatprep.subr.mxu0 0.0
    %136 = vmatpush1.msra.mxu0 0.0
    %137 = vmatprep.subr.mxu0 0.0
    %138 = vmatpush1.msra.mxu0 0.0
    %139 = vmatprep.subr.mxu0 0.0
    %140 = vmatpush1.msra.mxu0 0.0
    %141 = vmatprep.subr.mxu0 0.0
    %142 = vmatpush1.msra.mxu0 0.0
    %143 = vmatprep.subr.mxu0 0.0
    %144 = vmatpush1.msra.mxu0 0.0
    %145 = vmatprep.subr.mxu0 0.0
    %146 = vmatpush1.msra.mxu0 0.0
    %147 = vmatprep.subr.mxu0 0.0
    %148 = vmatpush1.msra.mxu0 0.0
    %149 = vmatprep.subr.mxu0 0.0
    %150 = vmatpush1.msra.mxu0 0.0
    %151 = vmatprep.subr.mxu0 0.0
    %152 = vmatpush1.msra.mxu0 0.0
    %153 = vmatprep.subr.mxu0 0.0
    %154 = vmatpush1.msra.mxu0 0.0
    %155 = vmatprep.subr.mxu0 0.0
    %156 = vmatpush1.msra.mxu0 0.0
    %157 = vmatprep.subr.mxu0 0.0
    %158 = vmatpush1.msra.mxu0 0.0
    %159 = vmatprep.mubr.f32.mxu0 0.0
    %160 = vmatmul.mubr.f32.gmra.mrb[0].mxu0 %v90
    %v161 = vpop.f32.mrb[0].mxu0
    %v162 = vadd.f32 %v88, %v161
    %v163 = vpop.f32.mrb[0].mxu0
    %164 = vmatprep.mubr.f32.mxu0 0.0
    %165 = vmatmul.mubr.f32.gmra.mrb[0].mxu0 %v93
    %v166 = vpop.f32.mrb[0].mxu0
    %v167 = vadd.f32 %v88, %v166
    %v168 = vpop.f32.mrb[0].mxu0
    %169 = vdwg.mxu0
    %v170 = vld [vmem:[#allocation2 + $0x70] sm:$0xff]
    %v171 = vld [vmem:[#allocation2 + $0x78] sm:$0xff]
    %v172 = vld [vmem:[#allocation2 + $0x80] sm:$0xff]
    %v173 = vld [vmem:[#allocation2 + $0x88] sm:$0xff]
    %v174 = vld [vmem:[#allocation2 + $0x90] sm:$0x1]
    %177 = vrot.lane.b32.xlu0 %v162, 96
    %v178 = vpop.permute.xlu0 %177
    %179 = vrot.lane.b32.xlu0 %v167, 96
    %v180 = vpop.permute.xlu0 %179
    %vm181 = vcmask 64512
    %v182 = vsel %vm181, %v162, 0
    %v184 = vsel %vm181, %v167, 0
    %v186 = vsel %vm181, %v178, 0
    %v188 = vsel %vm181, %v180, 0
    %190 = vmatprep.subr.mxu0 0.0
    %191 = vmatpush1.xpose.msra.mxu0 %v186
    %192 = vmatprep.subr.mxu0 0.0
    %193 = vmatpush1.xpose.msra.mxu0 %v188
    %194 = vmatprep.subr.mxu0 0.0
    %195 = vmatpush1.xpose.msra.mxu0 0.0
    %196 = vmatprep.subr.mxu0 0.0
    %197 = vmatpush1.xpose.msra.mxu0 0.0
    %198 = vmatprep.subr.mxu0 0.0
    %199 = vmatpush1.xpose.msra.mxu0 0.0
    %200 = vmatprep.subr.mxu0 0.0
    %201 = vmatpush1.xpose.msra.mxu0 0.0
    %202 = vmatprep.subr.mxu0 0.0
    %203 = vmatpush1.xpose.msra.mxu0 0.0
    %204 = vmatprep.subr.mxu0 0.0
    %205 = vmatpush1.xpose.msra.mxu0 0.0
    %206 = vmatprep.subr.mxu0 0.0
    %207 = vmatpush1.xpose.msra.mxu0 0.0
    %208 = vmatprep.subr.mxu0 0.0
    %209 = vmatpush1.xpose.msra.mxu0 0.0
    %210 = vmatprep.subr.mxu0 0.0
    %211 = vmatpush1.xpose.msra.mxu0 0.0
    %212 = vmatprep.subr.mxu0 0.0
    %213 = vmatpush1.xpose.msra.mxu0 0.0
    %214 = vmatprep.subr.mxu0 0.0
    %215 = vmatpush1.xpose.msra.mxu0 0.0
    %216 = vmatprep.subr.mxu0 0.0
    %217 = vmatpush1.xpose.msra.mxu0 0.0
    %218 = vmatprep.subr.mxu0 0.0
    %219 = vmatpush1.xpose.msra.mxu0 0.0
    %220 = vmatprep.subr.mxu0 0.0
    %221 = vmatpush1.xpose.msra.mxu0 0.0
    %222 = vmatprep.subr.mxu0 0.0
    %223 = vmatpush1.xpose.msra.mxu0 0.0
    %224 = vmatprep.subr.mxu0 0.0
    %225 = vmatpush1.xpose.msra.mxu0 0.0
    %226 = vmatprep.subr.mxu0 0.0
    %227 = vmatpush1.xpose.msra.mxu0 0.0
    %228 = vmatprep.subr.mxu0 0.0
    %229 = vmatpush1.xpose.msra.mxu0 0.0
    %230 = vmatprep.subr.mxu0 0.0
    %231 = vmatpush1.xpose.msra.mxu0 0.0
    %232 = vmatprep.subr.mxu0 0.0
    %233 = vmatpush1.xpose.msra.mxu0 0.0
    %234 = vmatprep.subr.mxu0 0.0
    %235 = vmatpush1.xpose.msra.mxu0 0.0
    %236 = vmatprep.subr.mxu0 0.0
    %237 = vmatpush1.xpose.msra.mxu0 0.0
    %238 = vmatprep.subr.mxu0 0.0
    %239 = vmatpush1.xpose.msra.mxu0 0.0
    %240 = vmatprep.subr.mxu0 0.0
    %241 = vmatpush1.xpose.msra.mxu0 0.0
    %242 = vmatprep.subr.mxu0 0.0
    %243 = vmatpush1.xpose.msra.mxu0 0.0
    %244 = vmatprep.subr.mxu0 0.0
    %245 = vmatpush1.xpose.msra.mxu0 0.0
    %246 = vmatprep.subr.mxu0 0.0
    %247 = vmatpush1.xpose.msra.mxu0 0.0
    %248 = vmatprep.subr.mxu0 0.0
    %249 = vmatpush1.xpose.msra.mxu0 0.0
    %250 = vmatprep.subr.mxu0 0.0
    %251 = vmatpush1.xpose.msra.mxu0 0.0
    %252 = vmatprep.subr.mxu0 0.0
    %253 = vmatpush1.xpose.msra.mxu0 0.0
    %254 = vmatprep.mubr.f32.mxu0 0.0
    %255 = vmatmul.mubr.f32.gmra.mrb[0].mxu0 %v182
    %v256 = vpop.f32.mrb[0].mxu0
    %v257 = vadd.f32 0.0, %v256
    %v258 = vpop.f32.mrb[0].mxu0
    %259 = vmatprep.mubr.f32.mxu0 0.0
    %260 = vmatmul.mubr.f32.gmra.mrb[0].mxu0 %v184
    %v261 = vpop.f32.mrb[0].mxu0
    %v262 = vadd.f32 0.0, %v261
    %v263 = vpop.f32.mrb[0].mxu0
    %264 = vdwg.mxu0
    %265 = vrot.lane.b32.xlu0 %v162, 120
    %v266 = vpop.permute.xlu0 %265
    %267 = vrot.lane.b32.xlu0 %v167, 120
    %v268 = vpop.permute.xlu0 %267
    %269 = vrot.lane.b32.xlu0 %v162, 88
    %v270 = vpop.permute.xlu0 %269
    %271 = vrot.lane.b32.xlu0 %v167, 88
    %v272 = vpop.permute.xlu0 %271
    %v273 = vsel %vm181, %v266, 0
    %v275 = vsel %vm181, %v268, 0
    %v277 = vsel %vm181, %v270, 0
    %v279 = vsel %vm181, %v272, 0
    %281 = vmatprep.subr.mxu0 0.0
    %282 = vmatpush1.xpose.msra.mxu0 %v277
    %283 = vmatprep.subr.mxu0 0.0
    %284 = vmatpush1.xpose.msra.mxu0 %v279
    %285 = vmatprep.subr.mxu0 0.0
    %286 = vmatpush1.xpose.msra.mxu0 0.0
    %287 = vmatprep.subr.mxu0 0.0
    %288 = vmatpush1.xpose.msra.mxu0 0.0
    %289 = vmatprep.subr.mxu0 0.0
    %290 = vmatpush1.xpose.msra.mxu0 0.0
    %291 = vmatprep.subr.mxu0 0.0
    %292 = vmatpush1.xpose.msra.mxu0 0.0
    %293 = vmatprep.subr.mxu0 0.0
    %294 = vmatpush1.xpose.msra.mxu0 0.0
    %295 = vmatprep.subr.mxu0 0.0
    %296 = vmatpush1.xpose.msra.mxu0 0.0
    %297 = vmatprep.subr.mxu0 0.0
    %298 = vmatpush1.xpose.msra.mxu0 0.0
    %299 = vmatprep.subr.mxu0 0.0
    %300 = vmatpush1.xpose.msra.mxu0 0.0
    %301 = vmatprep.subr.mxu0 0.0
    %302 = vmatpush1.xpose.msra.mxu0 0.0
    %303 = vmatprep.subr.mxu0 0.0
    %304 = vmatpush1.xpose.msra.mxu0 0.0
    %305 = vmatprep.subr.mxu0 0.0
    %306 = vmatpush1.xpose.msra.mxu0 0.0
    %307 = vmatprep.subr.mxu0 0.0
    %308 = vmatpush1.xpose.msra.mxu0 0.0
    %309 = vmatprep.subr.mxu0 0.0
    %310 = vmatpush1.xpose.msra.mxu0 0.0
    %311 = vmatprep.subr.mxu0 0.0
    %312 = vmatpush1.xpose.msra.mxu0 0.0
    %313 = vmatprep.subr.mxu0 0.0
    %314 = vmatpush1.xpose.msra.mxu0 0.0
    %315 = vmatprep.subr.mxu0 0.0
    %316 = vmatpush1.xpose.msra.mxu0 0.0
    %317 = vmatprep.subr.mxu0 0.0
    %318 = vmatpush1.xpose.msra.mxu0 0.0
    %319 = vmatprep.subr.mxu0 0.0
    %320 = vmatpush1.xpose.msra.mxu0 0.0
    %321 = vmatprep.subr.mxu0 0.0
    %322 = vmatpush1.xpose.msra.mxu0 0.0
    %323 = vmatprep.subr.mxu0 0.0
    %324 = vmatpush1.xpose.msra.mxu0 0.0
    %325 = vmatprep.subr.mxu0 0.0
    %326 = vmatpush1.xpose.msra.mxu0 0.0
    %327 = vmatprep.subr.mxu0 0.0
    %328 = vmatpush1.xpose.msra.mxu0 0.0
    %329 = vmatprep.subr.mxu0 0.0
    %330 = vmatpush1.xpose.msra.mxu0 0.0
    %331 = vmatprep.subr.mxu0 0.0
    %332 = vmatpush1.xpose.msra.mxu0 0.0
    %333 = vmatprep.subr.mxu0 0.0
    %334 = vmatpush1.xpose.msra.mxu0 0.0
    %335 = vmatprep.subr.mxu0 0.0
    %336 = vmatpush1.xpose.msra.mxu0 0.0
    %337 = vmatprep.subr.mxu0 0.0
    %338 = vmatpush1.xpose.msra.mxu0 0.0
    %339 = vmatprep.subr.mxu0 0.0
    %340 = vmatpush1.xpose.msra.mxu0 0.0
    %341 = vmatprep.subr.mxu0 0.0
    %342 = vmatpush1.xpose.msra.mxu0 0.0
    %343 = vmatprep.subr.mxu0 0.0
    %344 = vmatpush1.xpose.msra.mxu0 0.0
    %345 = vmatprep.mubr.f32.mxu0 0.0
    %346 = vmatmul.mubr.f32.gmra.mrb[0].mxu0 %v273
    %v347 = vpop.f32.mrb[0].mxu0
    %v348 = vadd.f32 0.0, %v347
    %v349 = vpop.f32.mrb[0].mxu0
    %350 = vmatprep.mubr.f32.mxu0 0.0
    %351 = vmatmul.mubr.f32.gmra.mrb[0].mxu0 %v275
    %v352 = vpop.f32.mrb[0].mxu0
    %v353 = vadd.f32 0.0, %v352
    %v354 = vpop.f32.mrb[0].mxu0
    %355 = vdwg.mxu0
    %356 = vrot.lane.b32.xlu0 %v162, 112
    %v357 = vpop.permute.xlu0 %356
    %358 = vrot.lane.b32.xlu0 %v167, 112
    %v359 = vpop.permute.xlu0 %358
    %360 = vrot.lane.b32.xlu0 %v162, 80
    %v361 = vpop.permute.xlu0 %360
    %362 = vrot.lane.b32.xlu0 %v167, 80
    %v363 = vpop.permute.xlu0 %362
    %v364 = vsel %vm181, %v357, 0
    %v366 = vsel %vm181, %v359, 0
    %v368 = vsel %vm181, %v361, 0
    %v370 = vsel %vm181, %v363, 0
    %372 = vmatprep.subr.mxu0 0.0
    %373 = vmatpush1.xpose.msra.mxu0 %v368
    %374 = vmatprep.subr.mxu0 0.0
    %375 = vmatpush1.xpose.msra.mxu0 %v370
    %376 = vmatprep.subr.mxu0 0.0
    %377 = vmatpush1.xpose.msra.mxu0 0.0
    %378 = vmatprep.subr.mxu0 0.0
    %379 = vmatpush1.xpose.msra.mxu0 0.0
    %380 = vmatprep.subr.mxu0 0.0
    %381 = vmatpush1.xpose.msra.mxu0 0.0
    %382 = vmatprep.subr.mxu0 0.0
    %383 = vmatpush1.xpose.msra.mxu0 0.0
    %384 = vmatprep.subr.mxu0 0.0
    %385 = vmatpush1.xpose.msra.mxu0 0.0
    %386 = vmatprep.subr.mxu0 0.0
    %387 = vmatpush1.xpose.msra.mxu0 0.0
    %388 = vmatprep.subr.mxu0 0.0
    %389 = vmatpush1.xpose.msra.mxu0 0.0
    %390 = vmatprep.subr.mxu0 0.0
    %391 = vmatpush1.xpose.msra.mxu0 0.0
    %392 = vmatprep.subr.mxu0 0.0
    %393 = vmatpush1.xpose.msra.mxu0 0.0
    %394 = vmatprep.subr.mxu0 0.0
    %395 = vmatpush1.xpose.msra.mxu0 0.0
    %396 = vmatprep.subr.mxu0 0.0
    %397 = vmatpush1.xpose.msra.mxu0 0.0
    %398 = vmatprep.subr.mxu0 0.0
    %399 = vmatpush1.xpose.msra.mxu0 0.0
    %400 = vmatprep.subr.mxu0 0.0
    %401 = vmatpush1.xpose.msra.mxu0 0.0
    %402 = vmatprep.subr.mxu0 0.0
    %403 = vmatpush1.xpose.msra.mxu0 0.0
    %404 = vmatprep.subr.mxu0 0.0
    %405 = vmatpush1.xpose.msra.mxu0 0.0
    %406 = vmatprep.subr.mxu0 0.0
    %407 = vmatpush1.xpose.msra.mxu0 0.0
    %408 = vmatprep.subr.mxu0 0.0
    %409 = vmatpush1.xpose.msra.mxu0 0.0
    %410 = vmatprep.subr.mxu0 0.0
    %411 = vmatpush1.xpose.msra.mxu0 0.0
    %412 = vmatprep.subr.mxu0 0.0
    %413 = vmatpush1.xpose.msra.mxu0 0.0
    %414 = vmatprep.subr.mxu0 0.0
    %415 = vmatpush1.xpose.msra.mxu0 0.0
    %416 = vmatprep.subr.mxu0 0.0
    %417 = vmatpush1.xpose.msra.mxu0 0.0
    %418 = vmatprep.subr.mxu0 0.0
    %419 = vmatpush1.xpose.msra.mxu0 0.0
    %420 = vmatprep.subr.mxu0 0.0
    %421 = vmatpush1.xpose.msra.mxu0 0.0
    %422 = vmatprep.subr.mxu0 0.0
    %423 = vmatpush1.xpose.msra.mxu0 0.0
    %424 = vmatprep.subr.mxu0 0.0
    %425 = vmatpush1.xpose.msra.mxu0 0.0
    %426 = vmatprep.subr.mxu0 0.0
    %427 = vmatpush1.xpose.msra.mxu0 0.0
    %428 = vmatprep.subr.mxu0 0.0
    %429 = vmatpush1.xpose.msra.mxu0 0.0
    %430 = vmatprep.subr.mxu0 0.0
    %431 = vmatpush1.xpose.msra.mxu0 0.0
    %432 = vmatprep.subr.mxu0 0.0
    %433 = vmatpush1.xpose.msra.mxu0 0.0
    %434 = vmatprep.subr.mxu0 0.0
    %435 = vmatpush1.xpose.msra.mxu0 0.0
    %436 = vmatprep.mubr.f32.mxu0 0.0
    %437 = vmatmul.mubr.f32.gmra.mrb[0].mxu0 %v364
    %v438 = vpop.f32.mrb[0].mxu0
    %v439 = vadd.f32 0.0, %v438
    %v440 = vpop.f32.mrb[0].mxu0
    %441 = vmatprep.mubr.f32.mxu0 0.0
    %442 = vmatmul.mubr.f32.gmra.mrb[0].mxu0 %v366
    %v443 = vpop.f32.mrb[0].mxu0
    %v444 = vadd.f32 0.0, %v443
    %v445 = vpop.f32.mrb[0].mxu0
    %446 = vdwg.mxu0
    %447 = vrot.lane.b32.xlu0 %v162, 104
    %v448 = vpop.permute.xlu0 %447
    %449 = vrot.lane.b32.xlu0 %v167, 104
    %v450 = vpop.permute.xlu0 %449
    %451 = vrot.lane.b32.xlu0 %v162, 72
    %v452 = vpop.permute.xlu0 %451
    %453 = vrot.lane.b32.xlu0 %v167, 72
    %v454 = vpop.permute.xlu0 %453
    %v455 = vsel %vm181, %v448, 0
    %v457 = vsel %vm181, %v450, 0
    %v459 = vsel %vm181, %v452, 0
    %v461 = vsel %vm181, %v454, 0
    %463 = vmatprep.subr.mxu0 0.0
    %464 = vmatpush1.xpose.msra.mxu0 %v459
    %465 = vmatprep.subr.mxu0 0.0
    %466 = vmatpush1.xpose.msra.mxu0 %v461
    %467 = vmatprep.subr.mxu0 0.0
    %468 = vmatpush1.xpose.msra.mxu0 0.0
    %469 = vmatprep.subr.mxu0 0.0
    %470 = vmatpush1.xpose.msra.mxu0 0.0
    %471 = vmatprep.subr.mxu0 0.0
    %472 = vmatpush1.xpose.msra.mxu0 0.0
    %473 = vmatprep.subr.mxu0 0.0
    %474 = vmatpush1.xpose.msra.mxu0 0.0
    %475 = vmatprep.subr.mxu0 0.0
    %476 = vmatpush1.xpose.msra.mxu0 0.0
    %477 = vmatprep.subr.mxu0 0.0
    %478 = vmatpush1.xpose.msra.mxu0 0.0
    %479 = vmatprep.subr.mxu0 0.0
    %480 = vmatpush1.xpose.msra.mxu0 0.0
    %481 = vmatprep.subr.mxu0 0.0
    %482 = vmatpush1.xpose.msra.mxu0 0.0
    %483 = vmatprep.subr.mxu0 0.0
    %484 = vmatpush1.xpose.msra.mxu0 0.0
    %485 = vmatprep.subr.mxu0 0.0
    %486 = vmatpush1.xpose.msra.mxu0 0.0
    %487 = vmatprep.subr.mxu0 0.0
    %488 = vmatpush1.xpose.msra.mxu0 0.0
    %489 = vmatprep.subr.mxu0 0.0
    %490 = vmatpush1.xpose.msra.mxu0 0.0
    %491 = vmatprep.subr.mxu0 0.0
    %492 = vmatpush1.xpose.msra.mxu0 0.0
    %493 = vmatprep.subr.mxu0 0.0
    %494 = vmatpush1.xpose.msra.mxu0 0.0
    %495 = vmatprep.subr.mxu0 0.0
    %496 = vmatpush1.xpose.msra.mxu0 0.0
    %497 = vmatprep.subr.mxu0 0.0
    %498 = vmatpush1.xpose.msra.mxu0 0.0
    %499 = vmatprep.subr.mxu0 0.0
    %500 = vmatpush1.xpose.msra.mxu0 0.0
    %501 = vmatprep.subr.mxu0 0.0
    %502 = vmatpush1.xpose.msra.mxu0 0.0
    %503 = vmatprep.subr.mxu0 0.0
    %504 = vmatpush1.xpose.msra.mxu0 0.0
    %505 = vmatprep.subr.mxu0 0.0
    %506 = vmatpush1.xpose.msra.mxu0 0.0
    %507 = vmatprep.subr.mxu0 0.0
    %508 = vmatpush1.xpose.msra.mxu0 0.0
    %509 = vmatprep.subr.mxu0 0.0
    %510 = vmatpush1.xpose.msra.mxu0 0.0
    %511 = vmatprep.subr.mxu0 0.0
    %512 = vmatpush1.xpose.msra.mxu0 0.0
    %513 = vmatprep.subr.mxu0 0.0
    %514 = vmatpush1.xpose.msra.mxu0 0.0
    %515 = vmatprep.subr.mxu0 0.0
    %516 = vmatpush1.xpose.msra.mxu0 0.0
    %517 = vmatprep.subr.mxu0 0.0
    %518 = vmatpush1.xpose.msra.mxu0 0.0
    %519 = vmatprep.subr.mxu0 0.0
    %520 = vmatpush1.xpose.msra.mxu0 0.0
    %521 = vmatprep.subr.mxu0 0.0
    %522 = vmatpush1.xpose.msra.mxu0 0.0
    %523 = vmatprep.subr.mxu0 0.0
    %524 = vmatpush1.xpose.msra.mxu0 0.0
    %525 = vmatprep.subr.mxu0 0.0
    %526 = vmatpush1.xpose.msra.mxu0 0.0
    %527 = vmatprep.mubr.f32.mxu0 0.0
    %528 = vmatmul.mubr.f32.gmra.mrb[0].mxu0 %v455
    %v529 = vpop.f32.mrb[0].mxu0
    %v530 = vadd.f32 0.0, %v529
    %v531 = vpop.f32.mrb[0].mxu0
    %532 = vmatprep.mubr.f32.mxu0 0.0
    %533 = vmatmul.mubr.f32.gmra.mrb[0].mxu0 %v457
    %v534 = vpop.f32.mrb[0].mxu0
    %v535 = vadd.f32 0.0, %v534
    %v536 = vpop.f32.mrb[0].mxu0
    %537 = vdwg.mxu0
    %v538 = vadd.f32 %v257, %v30
    %v539 = vadd.f32 %v262, %v31
    %v540 = vadd.f32 %v348, %v32
    %v541 = vadd.f32 %v353, %v33
    %v542 = vadd.f32 %v439, %v34
    %v543 = vadd.f32 %v444, %v35
    %v544 = vadd.f32 %v530, %v36
    %v545 = vadd.f32 %v535, %v37
    %vm546 = vcmask 130048
    %v547 = vsel %vm546, %v538, -inf
    %548 = vmax.xlane.f32.xlu0 %v547
    %v549 = vpop.xlane.xlu0 %548
    %v550 = vsel %vm546, %v539, -inf
    %551 = vmax.xlane.f32.xlu0 %v550
    %v552 = vpop.xlane.xlu0 %551
    %v553 = vsel %vm546, %v540, -inf
    %554 = vmax.xlane.f32.xlu0 %v553
    %v555 = vpop.xlane.xlu0 %554
    %v556 = vsel %vm546, %v541, -inf
    %557 = vmax.xlane.f32.xlu0 %v556
    %v558 = vpop.xlane.xlu0 %557
    %v559 = vsel %vm546, %v542, -inf
    %560 = vmax.xlane.f32.xlu0 %v559
    %v561 = vpop.xlane.xlu0 %560
    %v562 = vsel %vm546, %v543, -inf
    %563 = vmax.xlane.f32.xlu0 %v562
    %v564 = vpop.xlane.xlu0 %563
    %v565 = vsel %vm546, %v544, -inf
    %566 = vmax.xlane.f32.xlu0 %v565
    %v567 = vpop.xlane.xlu0 %566
    %v568 = vsel %vm546, %v545, -inf
    %569 = vmax.xlane.f32.xlu0 %v568
    %v570 = vpop.xlane.xlu0 %569
    %v571 = vsub.f32 %v538, %v549
    %v572 = vsub.f32 %v539, %v552
    %v573 = vsub.f32 %v540, %v555
    %v574 = vsub.f32 %v541, %v558
    %v575 = vsub.f32 %v542, %v561
    %v576 = vsub.f32 %v543, %v564
    %v577 = vsub.f32 %v544, %v567
    %v578 = vsub.f32 %v545, %v570
    %v579 = vmul.f32 %v571, 1.442695
    %v580 = vpow.pop %v579
    %v581 = vmul.f32 %v572, 1.442695
    %v582 = vpow.pop %v581
    %v583 = vmul.f32 %v573, 1.442695
    %v584 = vpow.pop %v583
    %v585 = vmul.f32 %v574, 1.442695
    %v586 = vpow.pop %v585
    %v587 = vmul.f32 %v575, 1.442695
    %v588 = vpow.pop %v587
    %v589 = vmul.f32 %v576, 1.442695
    %v590 = vpow.pop %v589
    %v591 = vmul.f32 %v577, 1.442695
    %v592 = vpow.pop %v591
    %v593 = vmul.f32 %v578, 1.442695
    %v594 = vpow.pop %v593
    %v595 = vsel %vm546, %v580, 0.0
    %596 = vadd.xlane.f32.xlu0 %v595
    %v597 = vpop.xlane.xlu0 %596
    %v598 = vsel %vm546, %v582, 0.0
    %599 = vadd.xlane.f32.xlu0 %v598
    %v600 = vpop.xlane.xlu0 %599
    %v601 = vsel %vm546, %v584, 0.0
    %602 = vadd.xlane.f32.xlu0 %v601
    %v603 = vpop.xlane.xlu0 %602
    %v604 = vsel %vm546, %v586, 0.0
    %605 = vadd.xlane.f32.xlu0 %v604
    %v606 = vpop.xlane.xlu0 %605
    %v607 = vsel %vm546, %v588, 0.0
    %608 = vadd.xlane.f32.xlu0 %v607
    %v609 = vpop.xlane.xlu0 %608
    %v610 = vsel %vm546, %v590, 0.0
    %611 = vadd.xlane.f32.xlu0 %v610
    %v612 = vpop.xlane.xlu0 %611
    %v613 = vsel %vm546, %v592, 0.0
    %614 = vadd.xlane.f32.xlu0 %v613
    %v615 = vpop.xlane.xlu0 %614
    %v616 = vsel %vm546, %v594, 0.0
    %617 = vadd.xlane.f32.xlu0 %v616
    %v618 = vpop.xlane.xlu0 %617
    %v619 = vrcp.pop %v597
    %v620 = vrcp.pop %v600
    %v621 = vrcp.pop %v603
    %v622 = vrcp.pop %v606
    %v623 = vrcp.pop %v609
    %v624 = vrcp.pop %v612
    %v625 = vrcp.pop %v615
    %v626 = vrcp.pop %v618
    %v627 = vmul.f32 %v580, %v619
    %v628 = vmul.f32 %v582, %v620
    %v629 = vmul.f32 %v584, %v621
    %v630 = vmul.f32 %v586, %v622
    %v631 = vmul.f32 %v588, %v623
    %v632 = vmul.f32 %v590, %v624
    %v633 = vmul.f32 %v592, %v625
    %v634 = vmul.f32 %v594, %v626
    %635 = vrot.lane.b32.xlu0 %v162, 64
    %v636 = vpop.permute.xlu0 %635
    %637 = vrot.lane.b32.xlu0 %v167, 64
    %v638 = vpop.permute.xlu0 %637
    %v642 = vsel %vm546, %v627, 0
    %v645 = vsel %vm546, %v628, 0
    %647 = vmatprep.subr.mxu0 0.0
    %648 = vmatpush1.msra.mxu0 %v636
    %649 = vmatprep.subr.mxu0 0.0
    %650 = vmatpush1.msra.mxu0 %v638
    %651 = vmatprep.subr.mxu0 0.0
    %652 = vmatpush1.msra.mxu0 0.0
    %653 = vmatprep.subr.mxu0 0.0
    %654 = vmatpush1.msra.mxu0 0.0
    %655 = vmatprep.subr.mxu0 0.0
    %656 = vmatpush1.msra.mxu0 0.0
    %657 = vmatprep.subr.mxu0 0.0
    %658 = vmatpush1.msra.mxu0 0.0
    %659 = vmatprep.subr.mxu0 0.0
    %660 = vmatpush1.msra.mxu0 0.0
    %661 = vmatprep.subr.mxu0 0.0
    %662 = vmatpush1.msra.mxu0 0.0
    %663 = vmatprep.subr.mxu0 0.0
    %664 = vmatpush1.msra.mxu0 0.0
    %665 = vmatprep.subr.mxu0 0.0
    %666 = vmatpush1.msra.mxu0 0.0
    %667 = vmatprep.subr.mxu0 0.0
    %668 = vmatpush1.msra.mxu0 0.0
    %669 = vmatprep.subr.mxu0 0.0
    %670 = vmatpush1.msra.mxu0 0.0
    %671 = vmatprep.subr.mxu0 0.0
    %672 = vmatpush1.msra.mxu0 0.0
    %673 = vmatprep.subr.mxu0 0.0
    %674 = vmatpush1.msra.mxu0 0.0
    %675 = vmatprep.subr.mxu0 0.0
    %676 = vmatpush1.msra.mxu0 0.0
    %677 = vmatprep.subr.mxu0 0.0
    %678 = vmatpush1.msra.mxu0 0.0
    %679 = vmatprep.subr.mxu0 0.0
    %680 = vmatpush1.msra.mxu0 0.0
    %681 = vmatprep.subr.mxu0 0.0
    %682 = vmatpush1.msra.mxu0 0.0
    %683 = vmatprep.subr.mxu0 0.0
    %684 = vmatpush1.msra.mxu0 0.0
    %685 = vmatprep.subr.mxu0 0.0
    %686 = vmatpush1.msra.mxu0 0.0
    %687 = vmatprep.subr.mxu0 0.0
    %688 = vmatpush1.msra.mxu0 0.0
    %689 = vmatprep.subr.mxu0 0.0
    %690 = vmatpush1.msra.mxu0 0.0
    %691 = vmatprep.subr.mxu0 0.0
    %692 = vmatpush1.msra.mxu0 0.0
    %693 = vmatprep.subr.mxu0 0.0
    %694 = vmatpush1.msra.mxu0 0.0
    %695 = vmatprep.subr.mxu0 0.0
    %696 = vmatpush1.msra.mxu0 0.0
    %697 = vmatprep.subr.mxu0 0.0
    %698 = vmatpush1.msra.mxu0 0.0
    %699 = vmatprep.subr.mxu0 0.0
    %700 = vmatpush1.msra.mxu0 0.0
    %701 = vmatprep.subr.mxu0 0.0
    %702 = vmatpush1.msra.mxu0 0.0
    %703 = vmatprep.subr.mxu0 0.0
    %704 = vmatpush1.msra.mxu0 0.0
    %705 = vmatprep.subr.mxu0 0.0
    %706 = vmatpush1.msra.mxu0 0.0
    %707 = vmatprep.subr.mxu0 0.0
    %708 = vmatpush1.msra.mxu0 0.0
    %709 = vmatprep.subr.mxu0 0.0
    %710 = vmatpush1.msra.mxu0 0.0
    %711 = vmatprep.mubr.f32.mxu0 0.0
    %712 = vmatmul.mubr.f32.gmra.mrb[0].mxu0 %v642
    %v713 = vpop.f32.mrb[0].mxu0
    %v714 = vadd.f32 0.0, %v713
    %v715 = vpop.f32.mrb[0].mxu0
    %716 = vmatprep.mubr.f32.mxu0 0.0
    %717 = vmatmul.mubr.f32.gmra.mrb[0].mxu0 %v645
    %v718 = vpop.f32.mrb[0].mxu0
    %v719 = vadd.f32 0.0, %v718
    %v720 = vpop.f32.mrb[0].mxu0
    %721 = vdwg.mxu0
    %722 = vrot.lane.b32.xlu0 %v162, 56
    %v723 = vpop.permute.xlu0 %722
    %724 = vrot.lane.b32.xlu0 %v167, 56
    %v725 = vpop.permute.xlu0 %724
    %v729 = vsel %vm546, %v629, 0
    %v732 = vsel %vm546, %v630, 0
    %734 = vmatprep.subr.mxu0 0.0
    %735 = vmatpush1.msra.mxu0 %v723
    %736 = vmatprep.subr.mxu0 0.0
    %737 = vmatpush1.msra.mxu0 %v725
    %738 = vmatprep.subr.mxu0 0.0
    %739 = vmatpush1.msra.mxu0 0.0
    %740 = vmatprep.subr.mxu0 0.0
    %741 = vmatpush1.msra.mxu0 0.0
    %742 = vmatprep.subr.mxu0 0.0
    %743 = vmatpush1.msra.mxu0 0.0
    %744 = vmatprep.subr.mxu0 0.0
    %745 = vmatpush1.msra.mxu0 0.0
    %746 = vmatprep.subr.mxu0 0.0
    %747 = vmatpush1.msra.mxu0 0.0
    %748 = vmatprep.subr.mxu0 0.0
    %749 = vmatpush1.msra.mxu0 0.0
    %750 = vmatprep.subr.mxu0 0.0
    %751 = vmatpush1.msra.mxu0 0.0
    %752 = vmatprep.subr.mxu0 0.0
    %753 = vmatpush1.msra.mxu0 0.0
    %754 = vmatprep.subr.mxu0 0.0
    %755 = vmatpush1.msra.mxu0 0.0
    %756 = vmatprep.subr.mxu0 0.0
    %757 = vmatpush1.msra.mxu0 0.0
    %758 = vmatprep.subr.mxu0 0.0
    %759 = vmatpush1.msra.mxu0 0.0
    %760 = vmatprep.subr.mxu0 0.0
    %761 = vmatpush1.msra.mxu0 0.0
    %762 = vmatprep.subr.mxu0 0.0
    %763 = vmatpush1.msra.mxu0 0.0
    %764 = vmatprep.subr.mxu0 0.0
    %765 = vmatpush1.msra.mxu0 0.0
    %766 = vmatprep.subr.mxu0 0.0
    %767 = vmatpush1.msra.mxu0 0.0
    %768 = vmatprep.subr.mxu0 0.0
    %769 = vmatpush1.msra.mxu0 0.0
    %770 = vmatprep.subr.mxu0 0.0
    %771 = vmatpush1.msra.mxu0 0.0
    %772 = vmatprep.subr.mxu0 0.0
    %773 = vmatpush1.msra.mxu0 0.0
    %774 = vmatprep.subr.mxu0 0.0
    %775 = vmatpush1.msra.mxu0 0.0
    %776 = vmatprep.subr.mxu0 0.0
    %777 = vmatpush1.msra.mxu0 0.0
    %778 = vmatprep.subr.mxu0 0.0
    %779 = vmatpush1.msra.mxu0 0.0
    %780 = vmatprep.subr.mxu0 0.0
    %781 = vmatpush1.msra.mxu0 0.0
    %782 = vmatprep.subr.mxu0 0.0
    %783 = vmatpush1.msra.mxu0 0.0
    %784 = vmatprep.subr.mxu0 0.0
    %785 = vmatpush1.msra.mxu0 0.0
    %786 = vmatprep.subr.mxu0 0.0
    %787 = vmatpush1.msra.mxu0 0.0
    %788 = vmatprep.subr.mxu0 0.0
    %789 = vmatpush1.msra.mxu0 0.0
    %790 = vmatprep.subr.mxu0 0.0
    %791 = vmatpush1.msra.mxu0 0.0
    %792 = vmatprep.subr.mxu0 0.0
    %793 = vmatpush1.msra.mxu0 0.0
    %794 = vmatprep.subr.mxu0 0.0
    %795 = vmatpush1.msra.mxu0 0.0
    %796 = vmatprep.subr.mxu0 0.0
    %797 = vmatpush1.msra.mxu0 0.0
    %798 = vmatprep.mubr.f32.mxu0 0.0
    %799 = vmatmul.mubr.f32.gmra.mrb[0].mxu0 %v729
    %v800 = vpop.f32.mrb[0].mxu0
    %v801 = vadd.f32 0.0, %v800
    %v802 = vpop.f32.mrb[0].mxu0
    %803 = vmatprep.mubr.f32.mxu0 0.0
    %804 = vmatmul.mubr.f32.gmra.mrb[0].mxu0 %v732
    %v805 = vpop.f32.mrb[0].mxu0
    %v806 = vadd.f32 0.0, %v805
    %v807 = vpop.f32.mrb[0].mxu0
    %808 = vdwg.mxu0
    %809 = vrot.lane.b32.xlu0 %v162, 48
    %v810 = vpop.permute.xlu0 %809
    %811 = vrot.lane.b32.xlu0 %v167, 48
    %v812 = vpop.permute.xlu0 %811
    %v816 = vsel %vm546, %v631, 0
    %v819 = vsel %vm546, %v632, 0
    %821 = vmatprep.subr.mxu0 0.0
    %822 = vmatpush1.msra.mxu0 %v810
    %823 = vmatprep.subr.mxu0 0.0
    %824 = vmatpush1.msra.mxu0 %v812
    %825 = vmatprep.subr.mxu0 0.0
    %826 = vmatpush1.msra.mxu0 0.0
    %827 = vmatprep.subr.mxu0 0.0
    %828 = vmatpush1.msra.mxu0 0.0
    %829 = vmatprep.subr.mxu0 0.0
    %830 = vmatpush1.msra.mxu0 0.0
    %831 = vmatprep.subr.mxu0 0.0
    %832 = vmatpush1.msra.mxu0 0.0
    %833 = vmatprep.subr.mxu0 0.0
    %834 = vmatpush1.msra.mxu0 0.0
    %835 = vmatprep.subr.mxu0 0.0
    %836 = vmatpush1.msra.mxu0 0.0
    %837 = vmatprep.subr.mxu0 0.0
    %838 = vmatpush1.msra.mxu0 0.0
    %839 = vmatprep.subr.mxu0 0.0
    %840 = vmatpush1.msra.mxu0 0.0
    %841 = vmatprep.subr.mxu0 0.0
    %842 = vmatpush1.msra.mxu0 0.0
    %843 = vmatprep.subr.mxu0 0.0
    %844 = vmatpush1.msra.mxu0 0.0
    %845 = vmatprep.subr.mxu0 0.0
    %846 = vmatpush1.msra.mxu0 0.0
    %847 = vmatprep.subr.mxu0 0.0
    %848 = vmatpush1.msra.mxu0 0.0
    %849 = vmatprep.subr.mxu0 0.0
    %850 = vmatpush1.msra.mxu0 0.0
    %851 = vmatprep.subr.mxu0 0.0
    %852 = vmatpush1.msra.mxu0 0.0
    %853 = vmatprep.subr.mxu0 0.0
    %854 = vmatpush1.msra.mxu0 0.0
    %855 = vmatprep.subr.mxu0 0.0
    %856 = vmatpush1.msra.mxu0 0.0
    %857 = vmatprep.subr.mxu0 0.0
    %858 = vmatpush1.msra.mxu0 0.0
    %859 = vmatprep.subr.mxu0 0.0
    %860 = vmatpush1.msra.mxu0 0.0
    %861 = vmatprep.subr.mxu0 0.0
    %862 = vmatpush1.msra.mxu0 0.0
    %863 = vmatprep.subr.mxu0 0.0
    %864 = vmatpush1.msra.mxu0 0.0
    %865 = vmatprep.subr.mxu0 0.0
    %866 = vmatpush1.msra.mxu0 0.0
    %867 = vmatprep.subr.mxu0 0.0
    %868 = vmatpush1.msra.mxu0 0.0
    %869 = vmatprep.subr.mxu0 0.0
    %870 = vmatpush1.msra.mxu0 0.0
    %871 = vmatprep.subr.mxu0 0.0
    %872 = vmatpush1.msra.mxu0 0.0
    %873 = vmatprep.subr.mxu0 0.0
    %874 = vmatpush1.msra.mxu0 0.0
    %875 = vmatprep.subr.mxu0 0.0
    %876 = vmatpush1.msra.mxu0 0.0
    %877 = vmatprep.subr.mxu0 0.0
    %878 = vmatpush1.msra.mxu0 0.0
    %879 = vmatprep.subr.mxu0 0.0
    %880 = vmatpush1.msra.mxu0 0.0
    %881 = vmatprep.subr.mxu0 0.0
    %882 = vmatpush1.msra.mxu0 0.0
    %883 = vmatprep.subr.mxu0 0.0
    %884 = vmatpush1.msra.mxu0 0.0
    %885 = vmatprep.mubr.f32.mxu0 0.0
    %886 = vmatmul.mubr.f32.gmra.mrb[0].mxu0 %v816
    %v887 = vpop.f32.mrb[0].mxu0
    %v888 = vadd.f32 0.0, %v887
    %v889 = vpop.f32.mrb[0].mxu0
    %890 = vmatprep.mubr.f32.mxu0 0.0
    %891 = vmatmul.mubr.f32.gmra.mrb[0].mxu0 %v819
    %v892 = vpop.f32.mrb[0].mxu0
    %v893 = vadd.f32 0.0, %v892
    %v894 = vpop.f32.mrb[0].mxu0
    %895 = vdwg.mxu0
    %896 = vrot.lane.b32.xlu0 %v162, 40
    %v897 = vpop.permute.xlu0 %896
    %898 = vrot.lane.b32.xlu0 %v167, 40
    %v899 = vpop.permute.xlu0 %898
    %v903 = vsel %vm546, %v633, 0
    %v906 = vsel %vm546, %v634, 0
    %908 = vmatprep.subr.mxu0 0.0
    %909 = vmatpush1.msra.mxu0 %v897
    %910 = vmatprep.subr.mxu0 0.0
    %911 = vmatpush1.msra.mxu0 %v899
    %912 = vmatprep.subr.mxu0 0.0
    %913 = vmatpush1.msra.mxu0 0.0
    %914 = vmatprep.subr.mxu0 0.0
    %915 = vmatpush1.msra.mxu0 0.0
    %916 = vmatprep.subr.mxu0 0.0
    %917 = vmatpush1.msra.mxu0 0.0
    %918 = vmatprep.subr.mxu0 0.0
    %919 = vmatpush1.msra.mxu0 0.0
    %920 = vmatprep.subr.mxu0 0.0
    %921 = vmatpush1.msra.mxu0 0.0
    %922 = vmatprep.subr.mxu0 0.0
    %923 = vmatpush1.msra.mxu0 0.0
    %924 = vmatprep.subr.mxu0 0.0
    %925 = vmatpush1.msra.mxu0 0.0
    %926 = vmatprep.subr.mxu0 0.0
    %927 = vmatpush1.msra.mxu0 0.0
    %928 = vmatprep.subr.mxu0 0.0
    %929 = vmatpush1.msra.mxu0 0.0
    %930 = vmatprep.subr.mxu0 0.0
    %931 = vmatpush1.msra.mxu0 0.0
    %932 = vmatprep.subr.mxu0 0.0
    %933 = vmatpush1.msra.mxu0 0.0
    %934 = vmatprep.subr.mxu0 0.0
    %935 = vmatpush1.msra.mxu0 0.0
    %936 = vmatprep.subr.mxu0 0.0
    %937 = vmatpush1.msra.mxu0 0.0
    %938 = vmatprep.subr.mxu0 0.0
    %939 = vmatpush1.msra.mxu0 0.0
    %940 = vmatprep.subr.mxu0 0.0
    %941 = vmatpush1.msra.mxu0 0.0
    %942 = vmatprep.subr.mxu0 0.0
    %943 = vmatpush1.msra.mxu0 0.0
    %944 = vmatprep.subr.mxu0 0.0
    %945 = vmatpush1.msra.mxu0 0.0
    %946 = vmatprep.subr.mxu0 0.0
    %947 = vmatpush1.msra.mxu0 0.0
    %948 = vmatprep.subr.mxu0 0.0
    %949 = vmatpush1.msra.mxu0 0.0
    %950 = vmatprep.subr.mxu0 0.0
    %951 = vmatpush1.msra.mxu0 0.0
    %952 = vmatprep.subr.mxu0 0.0
    %953 = vmatpush1.msra.mxu0 0.0
    %954 = vmatprep.subr.mxu0 0.0
    %955 = vmatpush1.msra.mxu0 0.0
    %956 = vmatprep.subr.mxu0 0.0
    %957 = vmatpush1.msra.mxu0 0.0
    %958 = vmatprep.subr.mxu0 0.0
    %959 = vmatpush1.msra.mxu0 0.0
    %960 = vmatprep.subr.mxu0 0.0
    %961 = vmatpush1.msra.mxu0 0.0
    %962 = vmatprep.subr.mxu0 0.0
    %963 = vmatpush1.msra.mxu0 0.0
    %964 = vmatprep.subr.mxu0 0.0
    %965 = vmatpush1.msra.mxu0 0.0
    %966 = vmatprep.subr.mxu0 0.0
    %967 = vmatpush1.msra.mxu0 0.0
    %968 = vmatprep.subr.mxu0 0.0
    %969 = vmatpush1.msra.mxu0 0.0
    %970 = vmatprep.subr.mxu0 0.0
    %971 = vmatpush1.msra.mxu0 0.0
    %972 = vmatprep.mubr.f32.mxu0 0.0
    %973 = vmatmul.mubr.f32.gmra.mrb[0].mxu0 %v903
    %v974 = vpop.f32.mrb[0].mxu0
    %v975 = vadd.f32 0.0, %v974
    %v976 = vpop.f32.mrb[0].mxu0
    %977 = vmatprep.mubr.f32.mxu0 0.0
    %978 = vmatmul.mubr.f32.gmra.mrb[0].mxu0 %v906
    %v979 = vpop.f32.mrb[0].mxu0
    %v980 = vadd.f32 0.0, %v979
    %v981 = vpop.f32.mrb[0].mxu0
    %982 = vdwg.mxu0
    %985 = vrot.lane.b32.xlu0 %v801, 8
    %v986 = vpop.permute.xlu0 %985
    %987 = vrot.lane.b32.xlu0 %v806, 8
    %v988 = vpop.permute.xlu0 %987
    %993 = vrot.lane.b32.xlu0 %v888, 16
    %v994 = vpop.permute.xlu0 %993
    %995 = vrot.lane.b32.xlu0 %v893, 16
    %v996 = vpop.permute.xlu0 %995
    %1001 = vrot.lane.b32.xlu0 %v975, 24
    %v1002 = vpop.permute.xlu0 %1001
    %1003 = vrot.lane.b32.xlu0 %v980, 24
    %v1004 = vpop.permute.xlu0 %1003
    %v1007 = vsel %vm181, %v714, %v986
    %v1008 = vsel %vm181, %v719, %v988
    %v1009 = vsel %vm546, %v1007, %v994
    %v1010 = vsel %vm546, %v1008, %v996
    %vm1011 = vcmask 195584
    %v1012 = vsel %vm1011, %v1009, %v1002
    %v1013 = vsel %vm1011, %v1010, %v1004
    %v1014 = vlaneseq
    %v1015 = vshrl.u32 %v1014, 7
    %v1016 = vsub.s32 0, %v1015
    %v1017 = vrot.slane %v174, %v1016
    %v1019 = vsel %vm40, %v1012, 0
    %v1022 = vsel %vm40, %v1013, 0
    %1024 = vmatprep.subr.mxu0 0.0
    %1025 = vmatpush1.msra.mxu0 %v170
    %1026 = vmatprep.subr.mxu0 0.0
    %1027 = vmatpush1.msra.mxu0 %v171
    %1028 = vmatprep.subr.mxu0 0.0
    %1029 = vmatpush1.msra.mxu0 %v172
    %1030 = vmatprep.subr.mxu0 0.0
    %1031 = vmatpush1.msra.mxu0 %v173
    %1032 = vmatprep.subr.mxu0 0.0
    %1033 = vmatpush1.msra.mxu0 0.0
    %1034 = vmatprep.subr.mxu0 0.0
    %1035 = vmatpush1.msra.mxu0 0.0
    %1036 = vmatprep.subr.mxu0 0.0
    %1037 = vmatpush1.msra.mxu0 0.0
    %1038 = vmatprep.subr.mxu0 0.0
    %1039 = vmatpush1.msra.mxu0 0.0
    %1040 = vmatprep.subr.mxu0 0.0
    %1041 = vmatpush1.msra.mxu0 0.0
    %1042 = vmatprep.subr.mxu0 0.0
    %1043 = vmatpush1.msra.mxu0 0.0
    %1044 = vmatprep.subr.mxu0 0.0
    %1045 = vmatpush1.msra.mxu0 0.0
    %1046 = vmatprep.subr.mxu0 0.0
    %1047 = vmatpush1.msra.mxu0 0.0
    %1048 = vmatprep.subr.mxu0 0.0
    %1049 = vmatpush1.msra.mxu0 0.0
    %1050 = vmatprep.subr.mxu0 0.0
    %1051 = vmatpush1.msra.mxu0 0.0
    %1052 = vmatprep.subr.mxu0 0.0
    %1053 = vmatpush1.msra.mxu0 0.0
    %1054 = vmatprep.subr.mxu0 0.0
    %1055 = vmatpush1.msra.mxu0 0.0
    %1056 = vmatprep.subr.mxu0 0.0
    %1057 = vmatpush1.msra.mxu0 0.0
    %1058 = vmatprep.subr.mxu0 0.0
    %1059 = vmatpush1.msra.mxu0 0.0
    %1060 = vmatprep.subr.mxu0 0.0
    %1061 = vmatpush1.msra.mxu0 0.0
    %1062 = vmatprep.subr.mxu0 0.0
    %1063 = vmatpush1.msra.mxu0 0.0
    %1064 = vmatprep.subr.mxu0 0.0
    %1065 = vmatpush1.msra.mxu0 0.0
    %1066 = vmatprep.subr.mxu0 0.0
    %1067 = vmatpush1.msra.mxu0 0.0
    %1068 = vmatprep.subr.mxu0 0.0
    %1069 = vmatpush1.msra.mxu0 0.0
    %1070 = vmatprep.subr.mxu0 0.0
    %1071 = vmatpush1.msra.mxu0 0.0
    %1072 = vmatprep.subr.mxu0 0.0
    %1073 = vmatpush1.msra.mxu0 0.0
    %1074 = vmatprep.subr.mxu0 0.0
    %1075 = vmatpush1.msra.mxu0 0.0
    %1076 = vmatprep.subr.mxu0 0.0
    %1077 = vmatpush1.msra.mxu0 0.0
    %1078 = vmatprep.subr.mxu0 0.0
    %1079 = vmatpush1.msra.mxu0 0.0
    %1080 = vmatprep.subr.mxu0 0.0
    %1081 = vmatpush1.msra.mxu0 0.0
    %1082 = vmatprep.subr.mxu0 0.0
    %1083 = vmatpush1.msra.mxu0 0.0
    %1084 = vmatprep.subr.mxu0 0.0
    %1085 = vmatpush1.msra.mxu0 0.0
    %1086 = vmatprep.subr.mxu0 0.0
    %1087 = vmatpush1.msra.mxu0 0.0
    %1088 = vmatprep.mubr.f32.mxu0 0.0
    %1089 = vmatmul.mubr.f32.gmra.mrb[0].mxu0 %v1019
    %v1090 = vpop.f32.mrb[0].mxu0
    %v1091 = vadd.f32 %v1017, %v1090
    %v1092 = vpop.f32.mrb[0].mxu0
    %1093 = vmatprep.mubr.f32.mxu0 0.0
    %1094 = vmatmul.mubr.f32.gmra.mrb[0].mxu0 %v1022
    %v1095 = vpop.f32.mrb[0].mxu0
    %v1096 = vadd.f32 %v1017, %v1095
    %v1097 = vpop.f32.mrb[0].mxu0
    %1098 = vdwg.mxu0
    %v1099 = vadd.f32 %v26, %v1091
    %v1100 = vadd.f32 %v27, %v1096
    %v1101 = vld [vmem:[#allocation2 + $0x2] sm:$0x1]
    %v1102 = vld [vmem:[#allocation2 + $0x3] sm:$0x1]
    %v1103 = vsel %vm40, %v1099, 0.0
    %1104 = vadd.xlane.f32.xlu0 %v1103
    %v1105 = vpop.xlane.xlu0 %1104
    %v1106 = vsel %vm40, %v1100, 0.0
    %1107 = vadd.xlane.f32.xlu0 %v1106
    %v1108 = vpop.xlane.xlu0 %1107
    %v1109 = vsel %vm40, %v28, 0.0
    %1110 = vadd.xlane.f32.xlu0 %v1109
    %v1111 = vpop.xlane.xlu0 %1110
    %v1112 = vsel %vm40, %v29, 0.0
    %1113 = vadd.xlane.f32.xlu0 %v1112
    %v1114 = vpop.xlane.xlu0 %1113
    %v1115 = vmul.f32 %v1105, %v47
    %v1116 = vmul.f32 %v1108, %v47
    %v1117 = vmul.f32 %v1111, %v47
    %v1118 = vmul.f32 %v1114, %v47
    %v1119 = vsub.f32 %v1099, %v1115
    %v1120 = vsub.f32 %v1100, %v1116
    %v1121 = vsub.f32 %v28, %v1117
    %v1122 = vsub.f32 %v29, %v1118
    %v1123 = vmul.f32 %v1119, %v1119
    %v1124 = vmul.f32 %v1120, %v1120
    %v1125 = vmul.f32 %v1121, %v1121
    %v1126 = vmul.f32 %v1122, %v1122
    %v1127 = vsel %vm40, %v1123, 0.0
    %1128 = vadd.xlane.f32.xlu0 %v1127
    %v1129 = vpop.xlane.xlu0 %1128
    %v1130 = vsel %vm40, %v1124, 0.0
    %1131 = vadd.xlane.f32.xlu0 %v1130
    %v1132 = vpop.xlane.xlu0 %1131
    %v1133 = vsel %vm40, %v1125, 0.0
    %1134 = vadd.xlane.f32.xlu0 %v1133
    %v1135 = vpop.xlane.xlu0 %1134
    %v1136 = vsel %vm40, %v1126, 0.0
    %1137 = vadd.xlane.f32.xlu0 %v1136
    %v1138 = vpop.xlane.xlu0 %1137
    %v1139 = vmul.f32 %v1129, %v47
    %v1140 = vmul.f32 %v1132, %v47
    %v1141 = vmul.f32 %v1135, %v47
    %v1142 = vmul.f32 %v1138, %v47
    %v1143 = vadd.f32 %v1139, 1e-05
    %v1144 = vadd.f32 %v1140, 1e-05
    %v1145 = vadd.f32 %v1141, 1e-05
    %v1146 = vadd.f32 %v1142, 1e-05
    %v1147 = vrsqrt.pop %v1143
    %v1148 = vrsqrt.pop %v1144
    %v1149 = vrsqrt.pop %v1145
    %v1150 = vrsqrt.pop %v1146
    %v1151 = vmul.f32 %v1119, %v1147
    %v1152 = vmul.f32 %v1120, %v1148
    %v1153 = vmul.f32 %v1121, %v1149
    %v1154 = vmul.f32 %v1122, %v1150
    %v1155 = vlaneseq
    %v1156 = vshrl.u32 %v1155, 7
    %v1157 = vsub.s32 0, %v1156
    %v1158 = vrot.slane %v1101, %v1157
    %v1159 = vmul.f32 %v1151, %v1158
    %v1160 = vmul.f32 %v1152, %v1158
    %v1161 = vmul.f32 %v1153, %v1158
    %v1162 = vmul.f32 %v1154, %v1158
    %v1163 = vlaneseq
    %v1164 = vshrl.u32 %v1163, 7
    %v1165 = vsub.s32 0, %v1164
    %v1166 = vrot.slane %v1102, %v1165
    %v1167 = vadd.f32 %v1159, %v1166
    %v1168 = vadd.f32 %v1160, %v1166
    %v1169 = vadd.f32 %v1161, %v1166
    %v1170 = vadd.f32 %v1162, %v1166
    %v1171 = vld [vmem:[#allocation2 + $0x98] sm:$0xff]
    %v1172 = vld [vmem:[#allocation2 + $0xa0] sm:$0xff]
    %v1173 = vld [vmem:[#allocation2 + $0xa8] sm:$0xff]
    %v1174 = vld [vmem:[#allocation2 + $0xb0] sm:$0xff]
    %v1175 = vld [vmem:[#allocation2 + $0xb8] sm:$0x1]
    %v1176 = vlaneseq
    %v1177 = vshrl.u32 %v1176, 7
    %v1178 = vsub.s32 0, %v1177
    %v1179 = vrot.slane %v1175, %v1178
    %v1181 = vsel %vm40, %v1167, 0
    %v1184 = vsel %vm40, %v1168, 0
    %v1187 = vsel %vm40, %v1169, 0
    %v1190 = vsel %vm40, %v1170, 0
    %1192 = vmatprep.subr.mxu0 0.0
    %1193 = vmatpush1.msra.mxu0 %v1171
    %1194 = vmatprep.subr.mxu0 0.0
    %1195 = vmatpush1.msra.mxu0 %v1172
    %1196 = vmatprep.subr.mxu0 0.0
    %1197 = vmatpush1.msra.mxu0 %v1173
    %1198 = vmatprep.subr.mxu0 0.0
    %1199 = vmatpush1.msra.mxu0 %v1174
    %1200 = vmatprep.subr.mxu0 0.0
    %1201 = vmatpush1.msra.mxu0 0.0
    %1202 = vmatprep.subr.mxu0 0.0
    %1203 = vmatpush1.msra.mxu0 0.0
    %1204 = vmatprep.subr.mxu0 0.0
    %1205 = vmatpush1.msra.mxu0 0.0
    %1206 = vmatprep.subr.mxu0 0.0
    %1207 = vmatpush1.msra.mxu0 0.0
    %1208 = vmatprep.subr.mxu0 0.0
    %1209 = vmatpush1.msra.mxu0 0.0
    %1210 = vmatprep.subr.mxu0 0.0
    %1211 = vmatpush1.msra.mxu0 0.0
    %1212 = vmatprep.subr.mxu0 0.0
    %1213 = vmatpush1.msra.mxu0 0.0
    %1214 = vmatprep.subr.mxu0 0.0
    %1215 = vmatpush1.msra.mxu0 0.0
    %1216 = vmatprep.subr.mxu0 0.0
    %1217 = vmatpush1.msra.mxu0 0.0
    %1218 = vmatprep.subr.mxu0 0.0
    %1219 = vmatpush1.msra.mxu0 0.0
    %1220 = vmatprep.subr.mxu0 0.0
    %1221 = vmatpush1.msra.mxu0 0.0
    %1222 = vmatprep.subr.mxu0 0.0
    %1223 = vmatpush1.msra.mxu0 0.0
    %1224 = vmatprep.subr.mxu0 0.0
    %1225 = vmatpush1.msra.mxu0 0.0
    %1226 = vmatprep.subr.mxu0 0.0
    %1227 = vmatpush1.msra.mxu0 0.0
    %1228 = vmatprep.subr.mxu0 0.0
    %1229 = vmatpush1.msra.mxu0 0.0
    %1230 = vmatprep.subr.mxu0 0.0
    %1231 = vmatpush1.msra.mxu0 0.0
    %1232 = vmatprep.subr.mxu0 0.0
    %1233 = vmatpush1.msra.mxu0 0.0
    %1234 = vmatprep.subr.mxu0 0.0
    %1235 = vmatpush1.msra.mxu0 0.0
    %1236 = vmatprep.subr.mxu0 0.0
    %1237 = vmatpush1.msra.mxu0 0.0
    %1238 = vmatprep.subr.mxu0 0.0
    %1239 = vmatpush1.msra.mxu0 0.0
    %1240 = vmatprep.subr.mxu0 0.0
    %1241 = vmatpush1.msra.mxu0 0.0
    %1242 = vmatprep.subr.mxu0 0.0
    %1243 = vmatpush1.msra.mxu0 0.0
    %1244 = vmatprep.subr.mxu0 0.0
    %1245 = vmatpush1.msra.mxu0 0.0
    %1246 = vmatprep.subr.mxu0 0.0
    %1247 = vmatpush1.msra.mxu0 0.0
    %1248 = vmatprep.subr.mxu0 0.0
    %1249 = vmatpush1.msra.mxu0 0.0
    %1250 = vmatprep.subr.mxu0 0.0
    %1251 = vmatpush1.msra.mxu0 0.0
    %1252 = vmatprep.subr.mxu0 0.0
    %1253 = vmatpush1.msra.mxu0 0.0
    %1254 = vmatprep.subr.mxu0 0.0
    %1255 = vmatpush1.msra.mxu0 0.0
    %1256 = vmatprep.mubr.f32.mxu0 0.0
    %1257 = vmatmul.mubr.f32.gmra.mrb[0].mxu0 %v1181
    %v1258 = vpop.f32.mrb[0].mxu0
    %v1259 = vadd.f32 %v1179, %v1258
    %v1260 = vpop.f32.mrb[0].mxu0
    %1261 = vmatprep.mubr.f32.mxu0 0.0
    %1262 = vmatmul.mubr.f32.gmra.mrb[0].mxu0 %v1184
    %v1263 = vpop.f32.mrb[0].mxu0
    %v1264 = vadd.f32 %v1179, %v1263
    %v1265 = vpop.f32.mrb[0].mxu0
    %1266 = vmatprep.mubr.f32.mxu0 0.0
    %1267 = vmatmul.mubr.f32.gmra.mrb[0].mxu0 %v1187
    %v1268 = vpop.f32.mrb[0].mxu0
    %v1269 = vadd.f32 %v1179, %v1268
    %v1270 = vpop.f32.mrb[0].mxu0
    %1271 = vmatprep.mubr.f32.mxu0 0.0
    %1272 = vmatmul.mubr.f32.gmra.mrb[0].mxu0 %v1190
    %v1273 = vpop.f32.mrb[0].mxu0
    %v1274 = vadd.f32 %v1179, %v1273
    %v1275 = vpop.f32.mrb[0].mxu0
    %1276 = vdwg.mxu0
    %v1277 = vld [vmem:[#allocation2 + $0xc0] sm:$0xff]
    %v1278 = vld [vmem:[#allocation2 + $0xc8] sm:$0xff]
    %v1279 = vld [vmem:[#allocation2 + $0xd0] sm:$0xff]
    %v1280 = vld [vmem:[#allocation2 + $0xd8] sm:$0xff]
    %v1281 = vld [vmem:[#allocation2 + $0xe0] sm:$0x1]
    %1284 = vrot.lane.b32.xlu0 %v1269, 96
    %v1285 = vpop.permute.xlu0 %1284
    %1286 = vrot.lane.b32.xlu0 %v1274, 96
    %v1287 = vpop.permute.xlu0 %1286
    %v1289 = vsel %vm181, %v1259, 0
    %v1292 = vsel %vm181, %v1264, 0
    %v1294 = vsel %vm181, %v1285, 0
    %v1296 = vsel %vm181, %v1287, 0
    %1298 = vmatprep.subr.mxu0 0.0
    %1299 = vmatpush1.xpose.msra.mxu0 %v1294
    %1300 = vmatprep.subr.mxu0 0.0
    %1301 = vmatpush1.xpose.msra.mxu0 %v1296
    %1302 = vmatprep.subr.mxu0 0.0
    %1303 = vmatpush1.xpose.msra.mxu0 0.0
    %1304 = vmatprep.subr.mxu0 0.0
    %1305 = vmatpush1.xpose.msra.mxu0 0.0
    %1306 = vmatprep.subr.mxu0 0.0
    %1307 = vmatpush1.xpose.msra.mxu0 0.0
    %1308 = vmatprep.subr.mxu0 0.0
    %1309 = vmatpush1.xpose.msra.mxu0 0.0
    %1310 = vmatprep.subr.mxu0 0.0
    %1311 = vmatpush1.xpose.msra.mxu0 0.0
    %1312 = vmatprep.subr.mxu0 0.0
    %1313 = vmatpush1.xpose.msra.mxu0 0.0
    %1314 = vmatprep.subr.mxu0 0.0
    %1315 = vmatpush1.xpose.msra.mxu0 0.0
    %1316 = vmatprep.subr.mxu0 0.0
    %1317 = vmatpush1.xpose.msra.mxu0 0.0
    %1318 = vmatprep.subr.mxu0 0.0
    %1319 = vmatpush1.xpose.msra.mxu0 0.0
    %1320 = vmatprep.subr.mxu0 0.0
    %1321 = vmatpush1.xpose.msra.mxu0 0.0
    %1322 = vmatprep.subr.mxu0 0.0
    %1323 = vmatpush1.xpose.msra.mxu0 0.0
    %1324 = vmatprep.subr.mxu0 0.0
    %1325 = vmatpush1.xpose.msra.mxu0 0.0
    %1326 = vmatprep.subr.mxu0 0.0
    %1327 = vmatpush1.xpose.msra.mxu0 0.0
    %1328 = vmatprep.subr.mxu0 0.0
    %1329 = vmatpush1.xpose.msra.mxu0 0.0
    %1330 = vmatprep.subr.mxu0 0.0
    %1331 = vmatpush1.xpose.msra.mxu0 0.0
    %1332 = vmatprep.subr.mxu0 0.0
    %1333 = vmatpush1.xpose.msra.mxu0 0.0
    %1334 = vmatprep.subr.mxu0 0.0
    %1335 = vmatpush1.xpose.msra.mxu0 0.0
    %1336 = vmatprep.subr.mxu0 0.0
    %1337 = vmatpush1.xpose.msra.mxu0 0.0
    %1338 = vmatprep.subr.mxu0 0.0
    %1339 = vmatpush1.xpose.msra.mxu0 0.0
    %1340 = vmatprep.subr.mxu0 0.0
    %1341 = vmatpush1.xpose.msra.mxu0 0.0
    %1342 = vmatprep.subr.mxu0 0.0
    %1343 = vmatpush1.xpose.msra.mxu0 0.0
    %1344 = vmatprep.subr.mxu0 0.0
    %1345 = vmatpush1.xpose.msra.mxu0 0.0
    %1346 = vmatprep.subr.mxu0 0.0
    %1347 = vmatpush1.xpose.msra.mxu0 0.0
    %1348 = vmatprep.subr.mxu0 0.0
    %1349 = vmatpush1.xpose.msra.mxu0 0.0
    %1350 = vmatprep.subr.mxu0 0.0
    %1351 = vmatpush1.xpose.msra.mxu0 0.0
    %1352 = vmatprep.subr.mxu0 0.0
    %1353 = vmatpush1.xpose.msra.mxu0 0.0
    %1354 = vmatprep.subr.mxu0 0.0
    %1355 = vmatpush1.xpose.msra.mxu0 0.0
    %1356 = vmatprep.subr.mxu0 0.0
    %1357 = vmatpush1.xpose.msra.mxu0 0.0
    %1358 = vmatprep.subr.mxu0 0.0
    %1359 = vmatpush1.xpose.msra.mxu0 0.0
    %1360 = vmatprep.subr.mxu0 0.0
    %1361 = vmatpush1.xpose.msra.mxu0 0.0
    %1362 = vmatprep.mubr.f32.mxu0 0.0
    %1363 = vmatmul.mubr.f32.gmra.mrb[0].mxu0 %v1289
    %v1364 = vpop.f32.mrb[0].mxu0
    %v1365 = vadd.f32 0.0, %v1364
    %v1366 = vpop.f32.mrb[0].mxu0
    %1367 = vmatprep.mubr.f32.mxu0 0.0
    %1368 = vmatmul.mubr.f32.gmra.mrb[0].mxu0 %v1292
    %v1369 = vpop.f32.mrb[0].mxu0
    %v1370 = vadd.f32 0.0, %v1369
    %v1371 = vpop.f32.mrb[0].mxu0
    %1372 = vdwg.mxu0
    %1373 = vrot.lane.b32.xlu0 %v1259, 120
    %v1374 = vpop.permute.xlu0 %1373
    %1375 = vrot.lane.b32.xlu0 %v1264, 120
    %v1376 = vpop.permute.xlu0 %1375
    %1377 = vrot.lane.b32.xlu0 %v1269, 88
    %v1378 = vpop.permute.xlu0 %1377
    %1379 = vrot.lane.b32.xlu0 %v1274, 88
    %v1380 = vpop.permute.xlu0 %1379
    %v1381 = vsel %vm181, %v1374, 0
    %v1383 = vsel %vm181, %v1376, 0
    %v1385 = vsel %vm181, %v1378, 0
    %v1387 = vsel %vm181, %v1380, 0
    %1389 = vmatprep.subr.mxu0 0.0
    %1390 = vmatpush1.xpose.msra.mxu0 %v1385
    %1391 = vmatprep.subr.mxu0 0.0
    %1392 = vmatpush1.xpose.msra.mxu0 %v1387
    %1393 = vmatprep.subr.mxu0 0.0
    %1394 = vmatpush1.xpose.msra.mxu0 0.0
    %1395 = vmatprep.subr.mxu0 0.0
    %1396 = vmatpush1.xpose.msra.mxu0 0.0
    %1397 = vmatprep.subr.mxu0 0.0
    %1398 = vmatpush1.xpose.msra.mxu0 0.0
    %1399 = vmatprep.subr.mxu0 0.0
    %1400 = vmatpush1.xpose.msra.mxu0 0.0
    %1401 = vmatprep.subr.mxu0 0.0
    %1402 = vmatpush1.xpose.msra.mxu0 0.0
    %1403 = vmatprep.subr.mxu0 0.0
    %1404 = vmatpush1.xpose.msra.mxu0 0.0
    %1405 = vmatprep.subr.mxu0 0.0
    %1406 = vmatpush1.xpose.msra.mxu0 0.0
    %1407 = vmatprep.subr.mxu0 0.0
    %1408 = vmatpush1.xpose.msra.mxu0 0.0
    %1409 = vmatprep.subr.mxu0 0.0
    %1410 = vmatpush1.xpose.msra.mxu0 0.0
    %1411 = vmatprep.subr.mxu0 0.0
    %1412 = vmatpush1.xpose.msra.mxu0 0.0
    %1413 = vmatprep.subr.mxu0 0.0
    %1414 = vmatpush1.xpose.msra.mxu0 0.0
    %1415 = vmatprep.subr.mxu0 0.0
    %1416 = vmatpush1.xpose.msra.mxu0 0.0
    %1417 = vmatprep.subr.mxu0 0.0
    %1418 = vmatpush1.xpose.msra.mxu0 0.0
    %1419 = vmatprep.subr.mxu0 0.0
    %1420 = vmatpush1.xpose.msra.mxu0 0.0
    %1421 = vmatprep.subr.mxu0 0.0
    %1422 = vmatpush1.xpose.msra.mxu0 0.0
    %1423 = vmatprep.subr.mxu0 0.0
    %1424 = vmatpush1.xpose.msra.mxu0 0.0
    %1425 = vmatprep.subr.mxu0 0.0
    %1426 = vmatpush1.xpose.msra.mxu0 0.0
    %1427 = vmatprep.subr.mxu0 0.0
    %1428 = vmatpush1.xpose.msra.mxu0 0.0
    %1429 = vmatprep.subr.mxu0 0.0
    %1430 = vmatpush1.xpose.msra.mxu0 0.0
    %1431 = vmatprep.subr.mxu0 0.0
    %1432 = vmatpush1.xpose.msra.mxu0 0.0
    %1433 = vmatprep.subr.mxu0 0.0
    %1434 = vmatpush1.xpose.msra.mxu0 0.0
    %1435 = vmatprep.subr.mxu0 0.0
    %1436 = vmatpush1.xpose.msra.mxu0 0.0
    %1437 = vmatprep.subr.mxu0 0.0
    %1438 = vmatpush1.xpose.msra.mxu0 0.0
    %1439 = vmatprep.subr.mxu0 0.0
    %1440 = vmatpush1.xpose.msra.mxu0 0.0
    %1441 = vmatprep.subr.mxu0 0.0
    %1442 = vmatpush1.xpose.msra.mxu0 0.0
    %1443 = vmatprep.subr.mxu0 0.0
    %1444 = vmatpush1.xpose.msra.mxu0 0.0
    %1445 = vmatprep.subr.mxu0 0.0
    %1446 = vmatpush1.xpose.msra.mxu0 0.0
    %1447 = vmatprep.subr.mxu0 0.0
    %1448 = vmatpush1.xpose.msra.mxu0 0.0
    %1449 = vmatprep.subr.mxu0 0.0
    %1450 = vmatpush1.xpose.msra.mxu0 0.0
    %1451 = vmatprep.subr.mxu0 0.0
    %1452 = vmatpush1.xpose.msra.mxu0 0.0
    %1453 = vmatprep.mubr.f32.mxu0 0.0
    %1454 = vmatmul.mubr.f32.gmra.mrb[0].mxu0 %v1381
    %v1455 = vpop.f32.mrb[0].mxu0
    %v1456 = vadd.f32 0.0, %v1455
    %v1457 = vpop.f32.mrb[0].mxu0
    %1458 = vmatprep.mubr.f32.mxu0 0.0
    %1459 = vmatmul.mubr.f32.gmra.mrb[0].mxu0 %v1383
    %v1460 = vpop.f32.mrb[0].mxu0
    %v1461 = vadd.f32 0.0, %v1460
    %v1462 = vpop.f32.mrb[0].mxu0
    %1463 = vdwg.mxu0
    %1464 = vrot.lane.b32.xlu0 %v1259, 112
    %v1465 = vpop.permute.xlu0 %1464
    %1466 = vrot.lane.b32.xlu0 %v1264, 112
    %v1467 = vpop.permute.xlu0 %1466
    %1468 = vrot.lane.b32.xlu0 %v1269, 80
    %v1469 = vpop.permute.xlu0 %1468
    %1470 = vrot.lane.b32.xlu0 %v1274, 80
    %v1471 = vpop.permute.xlu0 %1470
    %v1472 = vsel %vm181, %v1465, 0
    %v1474 = vsel %vm181, %v1467, 0
    %v1476 = vsel %vm181, %v1469, 0
    %v1478 = vsel %vm181, %v1471, 0
    %1480 = vmatprep.subr.mxu0 0.0
    %1481 = vmatpush1.xpose.msra.mxu0 %v1476
    %1482 = vmatprep.subr.mxu0 0.0
    %1483 = vmatpush1.xpose.msra.mxu0 %v1478
    %1484 = vmatprep.subr.mxu0 0.0
    %1485 = vmatpush1.xpose.msra.mxu0 0.0
    %1486 = vmatprep.subr.mxu0 0.0
    %1487 = vmatpush1.xpose.msra.mxu0 0.0
    %1488 = vmatprep.subr.mxu0 0.0
    %1489 = vmatpush1.xpose.msra.mxu0 0.0
    %1490 = vmatprep.subr.mxu0 0.0
    %1491 = vmatpush1.xpose.msra.mxu0 0.0
    %1492 = vmatprep.subr.mxu0 0.0
    %1493 = vmatpush1.xpose.msra.mxu0 0.0
    %1494 = vmatprep.subr.mxu0 0.0
    %1495 = vmatpush1.xpose.msra.mxu0 0.0
    %1496 = vmatprep.subr.mxu0 0.0
    %1497 = vmatpush1.xpose.msra.mxu0 0.0
    %1498 = vmatprep.subr.mxu0 0.0
    %1499 = vmatpush1.xpose.msra.mxu0 0.0
    %1500 = vmatprep.subr.mxu0 0.0
    %1501 = vmatpush1.xpose.msra.mxu0 0.0
    %1502 = vmatprep.subr.mxu0 0.0
    %1503 = vmatpush1.xpose.msra.mxu0 0.0
    %1504 = vmatprep.subr.mxu0 0.0
    %1505 = vmatpush1.xpose.msra.mxu0 0.0
    %1506 = vmatprep.subr.mxu0 0.0
    %1507 = vmatpush1.xpose.msra.mxu0 0.0
    %1508 = vmatprep.subr.mxu0 0.0
    %1509 = vmatpush1.xpose.msra.mxu0 0.0
    %1510 = vmatprep.subr.mxu0 0.0
    %1511 = vmatpush1.xpose.msra.mxu0 0.0
    %1512 = vmatprep.subr.mxu0 0.0
    %1513 = vmatpush1.xpose.msra.mxu0 0.0
    %1514 = vmatprep.subr.mxu0 0.0
    %1515 = vmatpush1.xpose.msra.mxu0 0.0
    %1516 = vmatprep.subr.mxu0 0.0
    %1517 = vmatpush1.xpose.msra.mxu0 0.0
    %1518 = vmatprep.subr.mxu0 0.0
    %1519 = vmatpush1.xpose.msra.mxu0 0.0
    %1520 = vmatprep.subr.mxu0 0.0
    %1521 = vmatpush1.xpose.msra.mxu0 0.0
    %1522 = vmatprep.subr.mxu0 0.0
    %1523 = vmatpush1.xpose.msra.mxu0 0.0
    %1524 = vmatprep.subr.mxu0 0.0
    %1525 = vmatpush1.xpose.msra.mxu0 0.0
    %1526 = vmatprep.subr.mxu0 0.0
    %1527 = vmatpush1.xpose.msra.mxu0 0.0
    %1528 = vmatprep.subr.mxu0 0.0
    %1529 = vmatpush1.xpose.msra.mxu0 0.0
    %1530 = vmatprep.subr.mxu0 0.0
    %1531 = vmatpush1.xpose.msra.mxu0 0.0
    %1532 = vmatprep.subr.mxu0 0.0
    %1533 = vmatpush1.xpose.msra.mxu0 0.0
    %1534 = vmatprep.subr.mxu0 0.0
    %1535 = vmatpush1.xpose.msra.mxu0 0.0
    %1536 = vmatprep.subr.mxu0 0.0
    %1537 = vmatpush1.xpose.msra.mxu0 0.0
    %1538 = vmatprep.subr.mxu0 0.0
    %1539 = vmatpush1.xpose.msra.mxu0 0.0
    %1540 = vmatprep.subr.mxu0 0.0
    %1541 = vmatpush1.xpose.msra.mxu0 0.0
    %1542 = vmatprep.subr.mxu0 0.0
    %1543 = vmatpush1.xpose.msra.mxu0 0.0
    %1544 = vmatprep.mubr.f32.mxu0 0.0
    %1545 = vmatmul.mubr.f32.gmra.mrb[0].mxu0 %v1472
    %v1546 = vpop.f32.mrb[0].mxu0
    %v1547 = vadd.f32 0.0, %v1546
    %v1548 = vpop.f32.mrb[0].mxu0
    %1549 = vmatprep.mubr.f32.mxu0 0.0
    %1550 = vmatmul.mubr.f32.gmra.mrb[0].mxu0 %v1474
    %v1551 = vpop.f32.mrb[0].mxu0
    %v1552 = vadd.f32 0.0, %v1551
    %v1553 = vpop.f32.mrb[0].mxu0
    %1554 = vdwg.mxu0
    %1555 = vrot.lane.b32.xlu0 %v1259, 104
    %v1556 = vpop.permute.xlu0 %1555
    %1557 = vrot.lane.b32.xlu0 %v1264, 104
    %v1558 = vpop.permute.xlu0 %1557
    %1559 = vrot.lane.b32.xlu0 %v1269, 72
    %v1560 = vpop.permute.xlu0 %1559
    %1561 = vrot.lane.b32.xlu0 %v1274, 72
    %v1562 = vpop.permute.xlu0 %1561
    %v1563 = vsel %vm181, %v1556, 0
    %v1565 = vsel %vm181, %v1558, 0
    %v1567 = vsel %vm181, %v1560, 0
    %v1569 = vsel %vm181, %v1562, 0
    %1571 = vmatprep.subr.mxu0 0.0
    %1572 = vmatpush1.xpose.msra.mxu0 %v1567
    %1573 = vmatprep.subr.mxu0 0.0
    %1574 = vmatpush1.xpose.msra.mxu0 %v1569
    %1575 = vmatprep.subr.mxu0 0.0
    %1576 = vmatpush1.xpose.msra.mxu0 0.0
    %1577 = vmatprep.subr.mxu0 0.0
    %1578 = vmatpush1.xpose.msra.mxu0 0.0
    %1579 = vmatprep.subr.mxu0 0.0
    %1580 = vmatpush1.xpose.msra.mxu0 0.0
    %1581 = vmatprep.subr.mxu0 0.0
    %1582 = vmatpush1.xpose.msra.mxu0 0.0
    %1583 = vmatprep.subr.mxu0 0.0
    %1584 = vmatpush1.xpose.msra.mxu0 0.0
    %1585 = vmatprep.subr.mxu0 0.0
    %1586 = vmatpush1.xpose.msra.mxu0 0.0
    %1587 = vmatprep.subr.mxu0 0.0
    %1588 = vmatpush1.xpose.msra.mxu0 0.0
    %1589 = vmatprep.subr.mxu0 0.0
    %1590 = vmatpush1.xpose.msra.mxu0 0.0
    %1591 = vmatprep.subr.mxu0 0.0
    %1592 = vmatpush1.xpose.msra.mxu0 0.0
    %1593 = vmatprep.subr.mxu0 0.0
    %1594 = vmatpush1.xpose.msra.mxu0 0.0
    %1595 = vmatprep.subr.mxu0 0.0
    %1596 = vmatpush1.xpose.msra.mxu0 0.0
    %1597 = vmatprep.subr.mxu0 0.0
    %1598 = vmatpush1.xpose.msra.mxu0 0.0
    %1599 = vmatprep.subr.mxu0 0.0
    %1600 = vmatpush1.xpose.msra.mxu0 0.0
    %1601 = vmatprep.subr.mxu0 0.0
    %1602 = vmatpush1.xpose.msra.mxu0 0.0
    %1603 = vmatprep.subr.mxu0 0.0
    %1604 = vmatpush1.xpose.msra.mxu0 0.0
    %1605 = vmatprep.subr.mxu0 0.0
    %1606 = vmatpush1.xpose.msra.mxu0 0.0
    %1607 = vmatprep.subr.mxu0 0.0
    %1608 = vmatpush1.xpose.msra.mxu0 0.0
    %1609 = vmatprep.subr.mxu0 0.0
    %1610 = vmatpush1.xpose.msra.mxu0 0.0
    %1611 = vmatprep.subr.mxu0 0.0
    %1612 = vmatpush1.xpose.msra.mxu0 0.0
    %1613 = vmatprep.subr.mxu0 0.0
    %1614 = vmatpush1.xpose.msra.mxu0 0.0
    %1615 = vmatprep.subr.mxu0 0.0
    %1616 = vmatpush1.xpose.msra.mxu0 0.0
    %1617 = vmatprep.subr.mxu0 0.0
    %1618 = vmatpush1.xpose.msra.mxu0 0.0
    %1619 = vmatprep.subr.mxu0 0.0
    %1620 = vmatpush1.xpose.msra.mxu0 0.0
    %1621 = vmatprep.subr.mxu0 0.0
    %1622 = vmatpush1.xpose.msra.mxu0 0.0
    %1623 = vmatprep.subr.mxu0 0.0
    %1624 = vmatpush1.xpose.msra.mxu0 0.0
    %1625 = vmatprep.subr.mxu0 0.0
    %1626 = vmatpush1.xpose.msra.mxu0 0.0
    %1627 = vmatprep.subr.mxu0 0.0
    %1628 = vmatpush1.xpose.msra.mxu0 0.0
    %1629 = vmatprep.subr.mxu0 0.0
    %1630 = vmatpush1.xpose.msra.mxu0 0.0
    %1631 = vmatprep.subr.mxu0 0.0
    %1632 = vmatpush1.xpose.msra.mxu0 0.0
    %1633 = vmatprep.subr.mxu0 0.0
    %1634 = vmatpush1.xpose.msra.mxu0 0.0
    %1635 = vmatprep.mubr.f32.mxu0 0.0
    %1636 = vmatmul.mubr.f32.gmra.mrb[0].mxu0 %v1563
    %v1637 = vpop.f32.mrb[0].mxu0
    %v1638 = vadd.f32 0.0, %v1637
    %v1639 = vpop.f32.mrb[0].mxu0
    %1640 = vmatprep.mubr.f32.mxu0 0.0
    %1641 = vmatmul.mubr.f32.gmra.mrb[0].mxu0 %v1565
    %v1642 = vpop.f32.mrb[0].mxu0
    %v1643 = vadd.f32 0.0, %v1642
    %v1644 = vpop.f32.mrb[0].mxu0
    %1645 = vdwg.mxu0
    %v1646 = vadd.f32 %v1365, %v30
    %v1647 = vadd.f32 %v1370, %v31
    %v1648 = vadd.f32 %v1456, %v32
    %v1649 = vadd.f32 %v1461, %v33
    %v1650 = vadd.f32 %v1547, %v34
    %v1651 = vadd.f32 %v1552, %v35
    %v1652 = vadd.f32 %v1638, %v36
    %v1653 = vadd.f32 %v1643, %v37
    %v1654 = vsel %vm546, %v1646, -inf
    %1655 = vmax.xlane.f32.xlu0 %v1654
    %v1656 = vpop.xlane.xlu0 %1655
    %v1657 = vsel %vm546, %v1647, -inf
    %1658 = vmax.xlane.f32.xlu0 %v1657
    %v1659 = vpop.xlane.xlu0 %1658
    %v1660 = vsel %vm546, %v1648, -inf
    %1661 = vmax.xlane.f32.xlu0 %v1660
    %v1662 = vpop.xlane.xlu0 %1661
    %v1663 = vsel %vm546, %v1649, -inf
    %1664 = vmax.xlane.f32.xlu0 %v1663
    %v1665 = vpop.xlane.xlu0 %1664
    %v1666 = vsel %vm546, %v1650, -inf
    %1667 = vmax.xlane.f32.xlu0 %v1666
    %v1668 = vpop.xlane.xlu0 %1667
    %v1669 = vsel %vm546, %v1651, -inf
    %1670 = vmax.xlane.f32.xlu0 %v1669
    %v1671 = vpop.xlane.xlu0 %1670
    %v1672 = vsel %vm546, %v1652, -inf
    %1673 = vmax.xlane.f32.xlu0 %v1672
    %v1674 = vpop.xlane.xlu0 %1673
    %v1675 = vsel %vm546, %v1653, -inf
    %1676 = vmax.xlane.f32.xlu0 %v1675
    %v1677 = vpop.xlane.xlu0 %1676
    %v1678 = vsub.f32 %v1646, %v1656
    %v1679 = vsub.f32 %v1647, %v1659
    %v1680 = vsub.f32 %v1648, %v1662
    %v1681 = vsub.f32 %v1649, %v1665
    %v1682 = vsub.f32 %v1650, %v1668
    %v1683 = vsub.f32 %v1651, %v1671
    %v1684 = vsub.f32 %v1652, %v1674
    %v1685 = vsub.f32 %v1653, %v1677
    %v1686 = vmul.f32 %v1678, 1.442695
    %v1687 = vpow.pop %v1686
    %v1688 = vmul.f32 %v1679, 1.442695
    %v1689 = vpow.pop %v1688
    %v1690 = vmul.f32 %v1680, 1.442695
    %v1691 = vpow.pop %v1690
    %v1692 = vmul.f32 %v1681, 1.442695
    %v1693 = vpow.pop %v1692
    %v1694 = vmul.f32 %v1682, 1.442695
    %v1695 = vpow.pop %v1694
    %v1696 = vmul.f32 %v1683, 1.442695
    %v1697 = vpow.pop %v1696
    %v1698 = vmul.f32 %v1684, 1.442695
    %v1699 = vpow.pop %v1698
    %v1700 = vmul.f32 %v1685, 1.442695
    %v1701 = vpow.pop %v1700
    %v1702 = vsel %vm546, %v1687, 0.0
    %1703 = vadd.xlane.f32.xlu0 %v1702
    %v1704 = vpop.xlane.xlu0 %1703
    %v1705 = vsel %vm546, %v1689, 0.0
    %1706 = vadd.xlane.f32.xlu0 %v1705
    %v1707 = vpop.xlane.xlu0 %1706
    %v1708 = vsel %vm546, %v1691, 0.0
    %1709 = vadd.xlane.f32.xlu0 %v1708
    %v1710 = vpop.xlane.xlu0 %1709
    %v1711 = vsel %vm546, %v1693, 0.0
    %1712 = vadd.xlane.f32.xlu0 %v1711
    %v1713 = vpop.xlane.xlu0 %1712
    %v1714 = vsel %vm546, %v1695, 0.0
    %1715 = vadd.xlane.f32.xlu0 %v1714
    %v1716 = vpop.xlane.xlu0 %1715
    %v1717 = vsel %vm546, %v1697, 0.0
    %1718 = vadd.xlane.f32.xlu0 %v1717
    %v1719 = vpop.xlane.xlu0 %1718
    %v1720 = vsel %vm546, %v1699, 0.0
    %1721 = vadd.xlane.f32.xlu0 %v1720
    %v1722 = vpop.xlane.xlu0 %1721
    %v1723 = vsel %vm546, %v1701, 0.0
    %1724 = vadd.xlane.f32.xlu0 %v1723
    %v1725 = vpop.xlane.xlu0 %1724
    %v1726 = vrcp.pop %v1704
    %v1727 = vrcp.pop %v1707
    %v1728 = vrcp.pop %v1710
    %v1729 = vrcp.pop %v1713
    %v1730 = vrcp.pop %v1716
    %v1731 = vrcp.pop %v1719
    %v1732 = vrcp.pop %v1722
    %v1733 = vrcp.pop %v1725
    %v1734 = vmul.f32 %v1687, %v1726
    %v1735 = vmul.f32 %v1689, %v1727
    %v1736 = vmul.f32 %v1691, %v1728
    %v1737 = vmul.f32 %v1693, %v1729
    %v1738 = vmul.f32 %v1695, %v1730
    %v1739 = vmul.f32 %v1697, %v1731
    %v1740 = vmul.f32 %v1699, %v1732
    %v1741 = vmul.f32 %v1701, %v1733
    %1742 = vrot.lane.b32.xlu0 %v1269, 64
    %v1743 = vpop.permute.xlu0 %1742
    %1744 = vrot.lane.b32.xlu0 %v1274, 64
    %v1745 = vpop.permute.xlu0 %1744
    %v1749 = vsel %vm546, %v1734, 0
    %v1752 = vsel %vm546, %v1735, 0
    %1754 = vmatprep.subr.mxu0 0.0
    %1755 = vmatpush1.msra.mxu0 %v1743
    %1756 = vmatprep.subr.mxu0 0.0
    %1757 = vmatpush1.msra.mxu0 %v1745
    %1758 = vmatprep.subr.mxu0 0.0
    %1759 = vmatpush1.msra.mxu0 0.0
    %1760 = vmatprep.subr.mxu0 0.0
    %1761 = vmatpush1.msra.mxu0 0.0
    %1762 = vmatprep.subr.mxu0 0.0
    %1763 = vmatpush1.msra.mxu0 0.0
    %1764 = vmatprep.subr.mxu0 0.0
    %1765 = vmatpush1.msra.mxu0 0.0
    %1766 = vmatprep.subr.mxu0 0.0
    %1767 = vmatpush1.msra.mxu0 0.0
    %1768 = vmatprep.subr.mxu0 0.0
    %1769 = vmatpush1.msra.mxu0 0.0
    %1770 = vmatprep.subr.mxu0 0.0
    %1771 = vmatpush1.msra.mxu0 0.0
    %1772 = vmatprep.subr.mxu0 0.0
    %1773 = vmatpush1.msra.mxu0 0.0
    %1774 = vmatprep.subr.mxu0 0.0
    %1775 = vmatpush1.msra.mxu0 0.0
    %1776 = vmatprep.subr.mxu0 0.0
    %1777 = vmatpush1.msra.mxu0 0.0
    %1778 = vmatprep.subr.mxu0 0.0
    %1779 = vmatpush1.msra.mxu0 0.0
    %1780 = vmatprep.subr.mxu0 0.0
    %1781 = vmatpush1.msra.mxu0 0.0
    %1782 = vmatprep.subr.mxu0 0.0
    %1783 = vmatpush1.msra.mxu0 0.0
    %1784 = vmatprep.subr.mxu0 0.0
    %1785 = vmatpush1.msra.mxu0 0.0
    %1786 = vmatprep.subr.mxu0 0.0
    %1787 = vmatpush1.msra.mxu0 0.0
    %1788 = vmatprep.subr.mxu0 0.0
    %1789 = vmatpush1.msra.mxu0 0.0
    %1790 = vmatprep.subr.mxu0 0.0
    %1791 = vmatpush1.msra.mxu0 0.0
    %1792 = vmatprep.subr.mxu0 0.0
    %1793 = vmatpush1.msra.mxu0 0.0
    %1794 = vmatprep.subr.mxu0 0.0
    %1795 = vmatpush1.msra.mxu0 0.0
    %1796 = vmatprep.subr.mxu0 0.0
    %1797 = vmatpush1.msra.mxu0 0.0
    %1798 = vmatprep.subr.mxu0 0.0
    %1799 = vmatpush1.msra.mxu0 0.0
    %1800 = vmatprep.subr.mxu0 0.0
    %1801 = vmatpush1.msra.mxu0 0.0
    %1802 = vmatprep.subr.mxu0 0.0
    %1803 = vmatpush1.msra.mxu0 0.0
    %1804 = vmatprep.subr.mxu0 0.0
    %1805 = vmatpush1.msra.mxu0 0.0
    %1806 = vmatprep.subr.mxu0 0.0
    %1807 = vmatpush1.msra.mxu0 0.0
    %1808 = vmatprep.subr.mxu0 0.0
    %1809 = vmatpush1.msra.mxu0 0.0
    %1810 = vmatprep.subr.mxu0 0.0
    %1811 = vmatpush1.msra.mxu0 0.0
    %1812 = vmatprep.subr.mxu0 0.0
    %1813 = vmatpush1.msra.mxu0 0.0
    %1814 = vmatprep.subr.mxu0 0.0
    %1815 = vmatpush1.msra.mxu0 0.0
    %1816 = vmatprep.subr.mxu0 0.0
    %1817 = vmatpush1.msra.mxu0 0.0
    %1818 = vmatprep.mubr.f32.mxu0 0.0
    %1819 = vmatmul.mubr.f32.gmra.mrb[0].mxu0 %v1749
    %v1820 = vpop.f32.mrb[0].mxu0
    %v1821 = vadd.f32 0.0, %v1820
    %v1822 = vpop.f32.mrb[0].mxu0
    %1823 = vmatprep.mubr.f32.mxu0 0.0
    %1824 = vmatmul.mubr.f32.gmra.mrb[0].mxu0 %v1752
    %v1825 = vpop.f32.mrb[0].mxu0
    %v1826 = vadd.f32 0.0, %v1825
    %v1827 = vpop.f32.mrb[0].mxu0
    %1828 = vdwg.mxu0
    %1829 = vrot.lane.b32.xlu0 %v1269, 56
    %v1830 = vpop.permute.xlu0 %1829
    %1831 = vrot.lane.b32.xlu0 %v1274, 56
    %v1832 = vpop.permute.xlu0 %1831
    %v1836 = vsel %vm546, %v1736, 0
    %v1839 = vsel %vm546, %v1737, 0
    %1841 = vmatprep.subr.mxu0 0.0
    %1842 = vmatpush1.msra.mxu0 %v1830
    %1843 = vmatprep.subr.mxu0 0.0
    %1844 = vmatpush1.msra.mxu0 %v1832
    %1845 = vmatprep.subr.mxu0 0.0
    %1846 = vmatpush1.msra.mxu0 0.0
    %1847 = vmatprep.subr.mxu0 0.0
    %1848 = vmatpush1.msra.mxu0 0.0
    %1849 = vmatprep.subr.mxu0 0.0
    %1850 = vmatpush1.msra.mxu0 0.0
    %1851 = vmatprep.subr.mxu0 0.0
    %1852 = vmatpush1.msra.mxu0 0.0
    %1853 = vmatprep.subr.mxu0 0.0
    %1854 = vmatpush1.msra.mxu0 0.0
    %1855 = vmatprep.subr.mxu0 0.0
    %1856 = vmatpush1.msra.mxu0 0.0
    %1857 = vmatprep.subr.mxu0 0.0
    %1858 = vmatpush1.msra.mxu0 0.0
    %1859 = vmatprep.subr.mxu0 0.0
    %1860 = vmatpush1.msra.mxu0 0.0
    %1861 = vmatprep.subr.mxu0 0.0
    %1862 = vmatpush1.msra.mxu0 0.0
    %1863 = vmatprep.subr.mxu0 0.0
    %1864 = vmatpush1.msra.mxu0 0.0
    %1865 = vmatprep.subr.mxu0 0.0
    %1866 = vmatpush1.msra.mxu0 0.0
    %1867 = vmatprep.subr.mxu0 0.0
    %1868 = vmatpush1.msra.mxu0 0.0
    %1869 = vmatprep.subr.mxu0 0.0
    %1870 = vmatpush1.msra.mxu0 0.0
    %1871 = vmatprep.subr.mxu0 0.0
    %1872 = vmatpush1.msra.mxu0 0.0
    %1873 = vmatprep.subr.mxu0 0.0
    %1874 = vmatpush1.msra.mxu0 0.0
    %1875 = vmatprep.subr.mxu0 0.0
    %1876 = vmatpush1.msra.mxu0 0.0
    %1877 = vmatprep.subr.mxu0 0.0
    %1878 = vmatpush1.msra.mxu0 0.0
    %1879 = vmatprep.subr.mxu0 0.0
    %1880 = vmatpush1.msra.mxu0 0.0
    %1881 = vmatprep.subr.mxu0 0.0
    %1882 = vmatpush1.msra.mxu0 0.0
    %1883 = vmatprep.subr.mxu0 0.0
    %1884 = vmatpush1.msra.mxu0 0.0
    %1885 = vmatprep.subr.mxu0 0.0
    %1886 = vmatpush1.msra.mxu0 0.0
    %1887 = vmatprep.subr.mxu0 0.0
    %1888 = vmatpush1.msra.mxu0 0.0
    %1889 = vmatprep.subr.mxu0 0.0
    %1890 = vmatpush1.msra.mxu0 0.0
    %1891 = vmatprep.subr.mxu0 0.0
    %1892 = vmatpush1.msra.mxu0 0.0
    %1893 = vmatprep.subr.mxu0 0.0
    %1894 = vmatpush1.msra.mxu0 0.0
    %1895 = vmatprep.subr.mxu0 0.0
    %1896 = vmatpush1.msra.mxu0 0.0
    %1897 = vmatprep.subr.mxu0 0.0
    %1898 = vmatpush1.msra.mxu0 0.0
    %1899 = vmatprep.subr.mxu0 0.0
    %1900 = vmatpush1.msra.mxu0 0.0
    %1901 = vmatprep.subr.mxu0 0.0
    %1902 = vmatpush1.msra.mxu0 0.0
    %1903 = vmatprep.subr.mxu0 0.0
    %1904 = vmatpush1.msra.mxu0 0.0
    %1905 = vmatprep.mubr.f32.mxu0 0.0
    %1906 = vmatmul.mubr.f32.gmra.mrb[0].mxu0 %v1836
    %v1907 = vpop.f32.mrb[0].mxu0
    %v1908 = vadd.f32 0.0, %v1907
    %v1909 = vpop.f32.mrb[0].mxu0
    %1910 = vmatprep.mubr.f32.mxu0 0.0
    %1911 = vmatmul.mubr.f32.gmra.mrb[0].mxu0 %v1839
    %v1912 = vpop.f32.mrb[0].mxu0
    %v1913 = vadd.f32 0.0, %v1912
    %v1914 = vpop.f32.mrb[0].mxu0
    %1915 = vdwg.mxu0
    %1916 = vrot.lane.b32.xlu0 %v1269, 48
    %v1917 = vpop.permute.xlu0 %1916
    %1918 = vrot.lane.b32.xlu0 %v1274, 48
    %v1919 = vpop.permute.xlu0 %1918
    %v1923 = vsel %vm546, %v1738, 0
    %v1926 = vsel %vm546, %v1739, 0
    %1928 = vmatprep.subr.mxu0 0.0
    %1929 = vmatpush1.msra.mxu0 %v1917
    %1930 = vmatprep.subr.mxu0 0.0
    %1931 = vmatpush1.msra.mxu0 %v1919
    %1932 = vmatprep.subr.mxu0 0.0
    %1933 = vmatpush1.msra.mxu0 0.0
    %1934 = vmatprep.subr.mxu0 0.0
    %1935 = vmatpush1.msra.mxu0 0.0
    %1936 = vmatprep.subr.mxu0 0.0
    %1937 = vmatpush1.msra.mxu0 0.0
    %1938 = vmatprep.subr.mxu0 0.0
    %1939 = vmatpush1.msra.mxu0 0.0
    %1940 = vmatprep.subr.mxu0 0.0
    %1941 = vmatpush1.msra.mxu0 0.0
    %1942 = vmatprep.subr.mxu0 0.0
    %1943 = vmatpush1.msra.mxu0 0.0
    %1944 = vmatprep.subr.mxu0 0.0
    %1945 = vmatpush1.msra.mxu0 0.0
    %1946 = vmatprep.subr.mxu0 0.0
    %1947 = vmatpush1.msra.mxu0 0.0
    %1948 = vmatprep.subr.mxu0 0.0
    %1949 = vmatpush1.msra.mxu0 0.0
    %1950 = vmatprep.subr.mxu0 0.0
    %1951 = vmatpush1.msra.mxu0 0.0
    %1952 = vmatprep.subr.mxu0 0.0
    %1953 = vmatpush1.msra.mxu0 0.0
    %1954 = vmatprep.subr.mxu0 0.0
    %1955 = vmatpush1.msra.mxu0 0.0
    %1956 = vmatprep.subr.mxu0 0.0
    %1957 = vmatpush1.msra.mxu0 0.0
    %1958 = vmatprep.subr.mxu0 0.0
    %1959 = vmatpush1.msra.mxu0 0.0
    %1960 = vmatprep.subr.mxu0 0.0
    %1961 = vmatpush1.msra.mxu0 0.0
    %1962 = vmatprep.subr.mxu0 0.0
    %1963 = vmatpush1.msra.mxu0 0.0
    %1964 = vmatprep.subr.mxu0 0.0
    %1965 = vmatpush1.msra.mxu0 0.0
    %1966 = vmatprep.subr.mxu0 0.0
    %1967 = vmatpush1.msra.mxu0 0.0
    %1968 = vmatprep.subr.mxu0 0.0
    %1969 = vmatpush1.msra.mxu0 0.0
    %1970 = vmatprep.subr.mxu0 0.0
    %1971 = vmatpush1.msra.mxu0 0.0
    %1972 = vmatprep.subr.mxu0 0.0
    %1973 = vmatpush1.msra.mxu0 0.0
    %1974 = vmatprep.subr.mxu0 0.0
    %1975 = vmatpush1.msra.mxu0 0.0
    %1976 = vmatprep.subr.mxu0 0.0
    %1977 = vmatpush1.msra.mxu0 0.0
    %1978 = vmatprep.subr.mxu0 0.0
    %1979 = vmatpush1.msra.mxu0 0.0
    %1980 = vmatprep.subr.mxu0 0.0
    %1981 = vmatpush1.msra.mxu0 0.0
    %1982 = vmatprep.subr.mxu0 0.0
    %1983 = vmatpush1.msra.mxu0 0.0
    %1984 = vmatprep.subr.mxu0 0.0
    %1985 = vmatpush1.msra.mxu0 0.0
    %1986 = vmatprep.subr.mxu0 0.0
    %1987 = vmatpush1.msra.mxu0 0.0
    %1988 = vmatprep.subr.mxu0 0.0
    %1989 = vmatpush1.msra.mxu0 0.0
    %1990 = vmatprep.subr.mxu0 0.0
    %1991 = vmatpush1.msra.mxu0 0.0
    %1992 = vmatprep.mubr.f32.mxu0 0.0
    %1993 = vmatmul.mubr.f32.gmra.mrb[0].mxu0 %v1923
    %v1994 = vpop.f32.mrb[0].mxu0
    %v1995 = vadd.f32 0.0, %v1994
    %v1996 = vpop.f32.mrb[0].mxu0
    %1997 = vmatprep.mubr.f32.mxu0 0.0
    %1998 = vmatmul.mubr.f32.gmra.mrb[0].mxu0 %v1926
    %v1999 = vpop.f32.mrb[0].mxu0
    %v2000 = vadd.f32 0.0, %v1999
    %v2001 = vpop.f32.mrb[0].mxu0
    %2002 = vdwg.mxu0
    %2003 = vrot.lane.b32.xlu0 %v1269, 40
    %v2004 = vpop.permute.xlu0 %2003
    %2005 = vrot.lane.b32.xlu0 %v1274, 40
    %v2006 = vpop.permute.xlu0 %2005
    %v2010 = vsel %vm546, %v1740, 0
    %v2013 = vsel %vm546, %v1741, 0
    %2015 = vmatprep.subr.mxu0 0.0
    %2016 = vmatpush1.msra.mxu0 %v2004
    %2017 = vmatprep.subr.mxu0 0.0
    %2018 = vmatpush1.msra.mxu0 %v2006
    %2019 = vmatprep.subr.mxu0 0.0
    %2020 = vmatpush1.msra.mxu0 0.0
    %2021 = vmatprep.subr.mxu0 0.0
    %2022 = vmatpush1.msra.mxu0 0.0
    %2023 = vmatprep.subr.mxu0 0.0
    %2024 = vmatpush1.msra.mxu0 0.0
    %2025 = vmatprep.subr.mxu0 0.0
    %2026 = vmatpush1.msra.mxu0 0.0
    %2027 = vmatprep.subr.mxu0 0.0
    %2028 = vmatpush1.msra.mxu0 0.0
    %2029 = vmatprep.subr.mxu0 0.0
    %2030 = vmatpush1.msra.mxu0 0.0
    %2031 = vmatprep.subr.mxu0 0.0
    %2032 = vmatpush1.msra.mxu0 0.0
    %2033 = vmatprep.subr.mxu0 0.0
    %2034 = vmatpush1.msra.mxu0 0.0
    %2035 = vmatprep.subr.mxu0 0.0
    %2036 = vmatpush1.msra.mxu0 0.0
    %2037 = vmatprep.subr.mxu0 0.0
    %2038 = vmatpush1.msra.mxu0 0.0
    %2039 = vmatprep.subr.mxu0 0.0
    %2040 = vmatpush1.msra.mxu0 0.0
    %2041 = vmatprep.subr.mxu0 0.0
    %2042 = vmatpush1.msra.mxu0 0.0
    %2043 = vmatprep.subr.mxu0 0.0
    %2044 = vmatpush1.msra.mxu0 0.0
    %2045 = vmatprep.subr.mxu0 0.0
    %2046 = vmatpush1.msra.mxu0 0.0
    %2047 = vmatprep.subr.mxu0 0.0
    %2048 = vmatpush1.msra.mxu0 0.0
    %2049 = vmatprep.subr.mxu0 0.0
    %2050 = vmatpush1.msra.mxu0 0.0
    %2051 = vmatprep.subr.mxu0 0.0
    %2052 = vmatpush1.msra.mxu0 0.0
    %2053 = vmatprep.subr.mxu0 0.0
    %2054 = vmatpush1.msra.mxu0 0.0
    %2055 = vmatprep.subr.mxu0 0.0
    %2056 = vmatpush1.msra.mxu0 0.0
    %2057 = vmatprep.subr.mxu0 0.0
    %2058 = vmatpush1.msra.mxu0 0.0
    %2059 = vmatprep.subr.mxu0 0.0
    %2060 = vmatpush1.msra.mxu0 0.0
    %2061 = vmatprep.subr.mxu0 0.0
    %2062 = vmatpush1.msra.mxu0 0.0
    %2063 = vmatprep.subr.mxu0 0.0
    %2064 = vmatpush1.msra.mxu0 0.0
    %2065 = vmatprep.subr.mxu0 0.0
    %2066 = vmatpush1.msra.mxu0 0.0
    %2067 = vmatprep.subr.mxu0 0.0
    %2068 = vmatpush1.msra.mxu0 0.0
    %2069 = vmatprep.subr.mxu0 0.0
    %2070 = vmatpush1.msra.mxu0 0.0
    %2071 = vmatprep.subr.mxu0 0.0
    %2072 = vmatpush1.msra.mxu0 0.0
    %2073 = vmatprep.subr.mxu0 0.0
    %2074 = vmatpush1.msra.mxu0 0.0
    %2075 = vmatprep.subr.mxu0 0.0
    %2076 = vmatpush1.msra.mxu0 0.0
    %2077 = vmatprep.subr.mxu0 0.0
    %2078 = vmatpush1.msra.mxu0 0.0
    %2079 = vmatprep.mubr.f32.mxu0 0.0
    %2080 = vmatmul.mubr.f32.gmra.mrb[0].mxu0 %v2010
    %v2081 = vpop.f32.mrb[0].mxu0
    %v2082 = vadd.f32 0.0, %v2081
    %v2083 = vpop.f32.mrb[0].mxu0
    %2084 = vmatprep.mubr.f32.mxu0 0.0
    %2085 = vmatmul.mubr.f32.gmra.mrb[0].mxu0 %v2013
    %v2086 = vpop.f32.mrb[0].mxu0
    %v2087 = vadd.f32 0.0, %v2086
    %v2088 = vpop.f32.mrb[0].mxu0
    %2089 = vdwg.mxu0
    %2092 = vrot.lane.b32.xlu0 %v1908, 8
    %v2093 = vpop.permute.xlu0 %2092
    %2094 = vrot.lane.b32.xlu0 %v1913, 8
    %v2095 = vpop.permute.xlu0 %2094
    %2100 = vrot.lane.b32.xlu0 %v1995, 16
    %v2101 = vpop.permute.xlu0 %2100
    %2102 = vrot.lane.b32.xlu0 %v2000, 16
    %v2103 = vpop.permute.xlu0 %2102
    %2108 = vrot.lane.b32.xlu0 %v2082, 24
    %v2109 = vpop.permute.xlu0 %2108
    %2110 = vrot.lane.b32.xlu0 %v2087, 24
    %v2111 = vpop.permute.xlu0 %2110
    %v2114 = vsel %vm181, %v1821, %v2093
    %v2115 = vsel %vm181, %v1826, %v2095
    %v2116 = vsel %vm546, %v2114, %v2101
    %v2117 = vsel %vm546, %v2115, %v2103
    %v2118 = vsel %vm1011, %v2116, %v2109
    %v2119 = vsel %vm1011, %v2117, %v2111
    %v2120 = vlaneseq
    %v2121 = vshrl.u32 %v2120, 7
    %v2122 = vsub.s32 0, %v2121
    %v2123 = vrot.slane %v1281, %v2122
    %v2125 = vsel %vm40, %v2118, 0
    %v2128 = vsel %vm40, %v2119, 0
    %2130 = vmatprep.subr.mxu0 0.0
    %2131 = vmatpush1.msra.mxu0 %v1277
    %2132 = vmatprep.subr.mxu0 0.0
    %2133 = vmatpush1.msra.mxu0 %v1278
    %2134 = vmatprep.subr.mxu0 0.0
    %2135 = vmatpush1.msra.mxu0 %v1279
    %2136 = vmatprep.subr.mxu0 0.0
    %2137 = vmatpush1.msra.mxu0 %v1280
    %2138 = vmatprep.subr.mxu0 0.0
    %2139 = vmatpush1.msra.mxu0 0.0
    %2140 = vmatprep.subr.mxu0 0.0
    %2141 = vmatpush1.msra.mxu0 0.0
    %2142 = vmatprep.subr.mxu0 0.0
    %2143 = vmatpush1.msra.mxu0 0.0
    %2144 = vmatprep.subr.mxu0 0.0
    %2145 = vmatpush1.msra.mxu0 0.0
    %2146 = vmatprep.subr.mxu0 0.0
    %2147 = vmatpush1.msra.mxu0 0.0
    %2148 = vmatprep.subr.mxu0 0.0
    %2149 = vmatpush1.msra.mxu0 0.0
    %2150 = vmatprep.subr.mxu0 0.0
    %2151 = vmatpush1.msra.mxu0 0.0
    %2152 = vmatprep.subr.mxu0 0.0
    %2153 = vmatpush1.msra.mxu0 0.0
    %2154 = vmatprep.subr.mxu0 0.0
    %2155 = vmatpush1.msra.mxu0 0.0
    %2156 = vmatprep.subr.mxu0 0.0
    %2157 = vmatpush1.msra.mxu0 0.0
    %2158 = vmatprep.subr.mxu0 0.0
    %2159 = vmatpush1.msra.mxu0 0.0
    %2160 = vmatprep.subr.mxu0 0.0
    %2161 = vmatpush1.msra.mxu0 0.0
    %2162 = vmatprep.subr.mxu0 0.0
    %2163 = vmatpush1.msra.mxu0 0.0
    %2164 = vmatprep.subr.mxu0 0.0
    %2165 = vmatpush1.msra.mxu0 0.0
    %2166 = vmatprep.subr.mxu0 0.0
    %2167 = vmatpush1.msra.mxu0 0.0
    %2168 = vmatprep.subr.mxu0 0.0
    %2169 = vmatpush1.msra.mxu0 0.0
    %2170 = vmatprep.subr.mxu0 0.0
    %2171 = vmatpush1.msra.mxu0 0.0
    %2172 = vmatprep.subr.mxu0 0.0
    %2173 = vmatpush1.msra.mxu0 0.0
    %2174 = vmatprep.subr.mxu0 0.0
    %2175 = vmatpush1.msra.mxu0 0.0
    %2176 = vmatprep.subr.mxu0 0.0
    %2177 = vmatpush1.msra.mxu0 0.0
    %2178 = vmatprep.subr.mxu0 0.0
    %2179 = vmatpush1.msra.mxu0 0.0
    %2180 = vmatprep.subr.mxu0 0.0
    %2181 = vmatpush1.msra.mxu0 0.0
    %2182 = vmatprep.subr.mxu0 0.0
    %2183 = vmatpush1.msra.mxu0 0.0
    %2184 = vmatprep.subr.mxu0 0.0
    %2185 = vmatpush1.msra.mxu0 0.0
    %2186 = vmatprep.subr.mxu0 0.0
    %2187 = vmatpush1.msra.mxu0 0.0
    %2188 = vmatprep.subr.mxu0 0.0
    %2189 = vmatpush1.msra.mxu0 0.0
    %2190 = vmatprep.subr.mxu0 0.0
    %2191 = vmatpush1.msra.mxu0 0.0
    %2192 = vmatprep.subr.mxu0 0.0
    %2193 = vmatpush1.msra.mxu0 0.0
    %2194 = vmatprep.mubr.f32.mxu0 0.0
    %2195 = vmatmul.mubr.f32.gmra.mrb[0].mxu0 %v2125
    %v2196 = vpop.f32.mrb[0].mxu0
    %v2197 = vadd.f32 %v2123, %v2196
    %v2198 = vpop.f32.mrb[0].mxu0
    %2199 = vmatprep.mubr.f32.mxu0 0.0
    %2200 = vmatmul.mubr.f32.gmra.mrb[0].mxu0 %v2128
    %v2201 = vpop.f32.mrb[0].mxu0
    %v2202 = vadd.f32 %v2123, %v2201
    %v2203 = vpop.f32.mrb[0].mxu0
    %2204 = vdwg.mxu0
    %v2205 = vadd.f32 %v1099, %v2197
    %v2206 = vadd.f32 %v1100, %v2202
    %v2207 = vld [vmem:[#allocation2 + $0x4] sm:$0x1]
    %v2208 = vld [vmem:[#allocation2 + $0x5] sm:$0x1]
    %v2209 = vsel %vm40, %v2205, 0.0
    %2210 = vadd.xlane.f32.xlu0 %v2209
    %v2211 = vpop.xlane.xlu0 %2210
    %v2212 = vsel %vm40, %v2206, 0.0
    %2213 = vadd.xlane.f32.xlu0 %v2212
    %v2214 = vpop.xlane.xlu0 %2213
    %v2215 = vmul.f32 %v2211, %v47
    %v2216 = vmul.f32 %v2214, %v47
    %v2217 = vsub.f32 %v2205, %v2215
    %v2218 = vsub.f32 %v2206, %v2216
    %v2219 = vmul.f32 %v2217, %v2217
    %v2220 = vmul.f32 %v2218, %v2218
    %v2221 = vsel %vm40, %v2219, 0.0
    %2222 = vadd.xlane.f32.xlu0 %v2221
    %v2223 = vpop.xlane.xlu0 %2222
    %v2224 = vsel %vm40, %v2220, 0.0
    %2225 = vadd.xlane.f32.xlu0 %v2224
    %v2226 = vpop.xlane.xlu0 %2225
    %v2227 = vmul.f32 %v2223, %v47
    %v2228 = vmul.f32 %v2226, %v47
    %v2229 = vadd.f32 %v2227, 1e-05
    %v2230 = vadd.f32 %v2228, 1e-05
    %v2231 = vrsqrt.pop %v2229
    %v2232 = vrsqrt.pop %v2230
    %v2233 = vmul.f32 %v2217, %v2231
    %v2234 = vmul.f32 %v2218, %v2232
    %v2235 = vlaneseq
    %v2236 = vshrl.u32 %v2235, 7
    %v2237 = vsub.s32 0, %v2236
    %v2238 = vrot.slane %v2207, %v2237
    %v2239 = vmul.f32 %v2233, %v2238
    %v2240 = vmul.f32 %v2234, %v2238
    %v2241 = vlaneseq
    %v2242 = vshrl.u32 %v2241, 7
    %v2243 = vsub.s32 0, %v2242
    %v2244 = vrot.slane %v2208, %v2243
    %v2245 = vadd.f32 %v2239, %v2244
    %v2246 = vadd.f32 %v2240, %v2244
    %v2247 = vld [vmem:[#allocation2 + $0xe8] sm:$0xff]
    %v2248 = vld [vmem:[#allocation2 + $0xf0] sm:$0xff]
    %v2249 = vld [vmem:[#allocation2 + $0xf8] sm:$0xff]
    %v2250 = vld [vmem:[#allocation2 + $0x100] sm:$0xff]
    %v2251 = vld [vmem:[#allocation2 + $0x108] sm:$0x1]
    %v2252 = vlaneseq
    %v2253 = vshrl.u32 %v2252, 7
    %v2254 = vsub.s32 0, %v2253
    %v2255 = vrot.slane %v2251, %v2254
    %v2257 = vsel %vm40, %v2245, 0
    %v2260 = vsel %vm40, %v2246, 0
    %2262 = vmatprep.subr.mxu0 0.0
    %2263 = vmatpush1.msra.mxu0 %v2247
    %2264 = vmatprep.subr.mxu0 0.0
    %2265 = vmatpush1.msra.mxu0 %v2248
    %2266 = vmatprep.subr.mxu0 0.0
    %2267 = vmatpush1.msra.mxu0 %v2249
    %2268 = vmatprep.subr.mxu0 0.0
    %2269 = vmatpush1.msra.mxu0 %v2250
    %2270 = vmatprep.subr.mxu0 0.0
    %2271 = vmatpush1.msra.mxu0 0.0
    %2272 = vmatprep.subr.mxu0 0.0
    %2273 = vmatpush1.msra.mxu0 0.0
    %2274 = vmatprep.subr.mxu0 0.0
    %2275 = vmatpush1.msra.mxu0 0.0
    %2276 = vmatprep.subr.mxu0 0.0
    %2277 = vmatpush1.msra.mxu0 0.0
    %2278 = vmatprep.subr.mxu0 0.0
    %2279 = vmatpush1.msra.mxu0 0.0
    %2280 = vmatprep.subr.mxu0 0.0
    %2281 = vmatpush1.msra.mxu0 0.0
    %2282 = vmatprep.subr.mxu0 0.0
    %2283 = vmatpush1.msra.mxu0 0.0
    %2284 = vmatprep.subr.mxu0 0.0
    %2285 = vmatpush1.msra.mxu0 0.0
    %2286 = vmatprep.subr.mxu0 0.0
    %2287 = vmatpush1.msra.mxu0 0.0
    %2288 = vmatprep.subr.mxu0 0.0
    %2289 = vmatpush1.msra.mxu0 0.0
    %2290 = vmatprep.subr.mxu0 0.0
    %2291 = vmatpush1.msra.mxu0 0.0
    %2292 = vmatprep.subr.mxu0 0.0
    %2293 = vmatpush1.msra.mxu0 0.0
    %2294 = vmatprep.subr.mxu0 0.0
    %2295 = vmatpush1.msra.mxu0 0.0
    %2296 = vmatprep.subr.mxu0 0.0
    %2297 = vmatpush1.msra.mxu0 0.0
    %2298 = vmatprep.subr.mxu0 0.0
    %2299 = vmatpush1.msra.mxu0 0.0
    %2300 = vmatprep.subr.mxu0 0.0
    %2301 = vmatpush1.msra.mxu0 0.0
    %2302 = vmatprep.subr.mxu0 0.0
    %2303 = vmatpush1.msra.mxu0 0.0
    %2304 = vmatprep.subr.mxu0 0.0
    %2305 = vmatpush1.msra.mxu0 0.0
    %2306 = vmatprep.subr.mxu0 0.0
    %2307 = vmatpush1.msra.mxu0 0.0
    %2308 = vmatprep.subr.mxu0 0.0
    %2309 = vmatpush1.msra.mxu0 0.0
    %2310 = vmatprep.subr.mxu0 0.0
    %2311 = vmatpush1.msra.mxu0 0.0
    %2312 = vmatprep.subr.mxu0 0.0
    %2313 = vmatpush1.msra.mxu0 0.0
    %2314 = vmatprep.subr.mxu0 0.0
    %2315 = vmatpush1.msra.mxu0 0.0
    %2316 = vmatprep.subr.mxu0 0.0
    %2317 = vmatpush1.msra.mxu0 0.0
    %2318 = vmatprep.subr.mxu0 0.0
    %2319 = vmatpush1.msra.mxu0 0.0
    %2320 = vmatprep.subr.mxu0 0.0
    %2321 = vmatpush1.msra.mxu0 0.0
    %2322 = vmatprep.subr.mxu0 0.0
    %2323 = vmatpush1.msra.mxu0 0.0
    %2324 = vmatprep.subr.mxu0 0.0
    %2325 = vmatpush1.msra.mxu0 0.0
    %2326 = vmatprep.mubr.f32.mxu0 0.0
    %2327 = vmatmul.mubr.f32.gmra.mrb[0].mxu0 %v2257
    %v2328 = vpop.f32.mrb[0].mxu0
    %v2329 = vadd.f32 %v2255, %v2328
    %v2330 = vpop.f32.mrb[0].mxu0
    %2331 = vmatprep.mubr.f32.mxu0 0.0
    %2332 = vmatmul.mubr.f32.gmra.mrb[0].mxu0 %v2260
    %v2333 = vpop.f32.mrb[0].mxu0
    %v2334 = vadd.f32 %v2255, %v2333
    %v2335 = vpop.f32.mrb[0].mxu0
    %2336 = vdwg.mxu0
    %v2337 = vmax.f32 %v2329, 0.0
    %v2338 = vmax.f32 %v2334, 0.0
    %v2339 = vld [vmem:[#allocation2 + $0x110] sm:$0xff]
    %v2340 = vld [vmem:[#allocation2 + $0x118] sm:$0xff]
    %v2341 = vld [vmem:[#allocation2 + $0x120] sm:$0xff]
    %v2342 = vld [vmem:[#allocation2 + $0x128] sm:$0xff]
    %v2343 = vld [vmem:[#allocation2 + $0x130] sm:$0xff]
    %v2344 = vld [vmem:[#allocation2 + $0x138] sm:$0xff]
    %v2345 = vld [vmem:[#allocation2 + $0x140] sm:$0xff]
    %v2346 = vld [vmem:[#allocation2 + $0x148] sm:$0xff]
    %v2347 = vld [vmem:[#allocation2 + $0x150] sm:$0x1]
    %v2348 = vlaneseq
    %v2349 = vshrl.u32 %v2348, 7
    %v2350 = vsub.s32 0, %v2349
    %v2351 = vrot.slane %v2347, %v2350
    %vm2352 = vcmask 523264
    %v2354 = vsel %vm2352, %v2337, 0
    %v2357 = vsel %vm2352, %v2338, 0
    %2359 = vmatprep.subr.mxu0 0.0
    %2360 = vmatpush1.msra.mxu0 %v2339
    %2361 = vmatprep.subr.mxu0 0.0
    %2362 = vmatpush1.msra.mxu0 %v2340
    %2363 = vmatprep.subr.mxu0 0.0
    %2364 = vmatpush1.msra.mxu0 %v2341
    %2365 = vmatprep.subr.mxu0 0.0
    %2366 = vmatpush1.msra.mxu0 %v2342
    %2367 = vmatprep.subr.mxu0 0.0
    %2368 = vmatpush1.msra.mxu0 %v2343
    %2369 = vmatprep.subr.mxu0 0.0
    %2370 = vmatpush1.msra.mxu0 %v2344
    %2371 = vmatprep.subr.mxu0 0.0
    %2372 = vmatpush1.msra.mxu0 %v2345
    %2373 = vmatprep.subr.mxu0 0.0
    %2374 = vmatpush1.msra.mxu0 %v2346
    %2375 = vmatprep.subr.mxu0 0.0
    %2376 = vmatpush1.msra.mxu0 0.0
    %2377 = vmatprep.subr.mxu0 0.0
    %2378 = vmatpush1.msra.mxu0 0.0
    %2379 = vmatprep.subr.mxu0 0.0
    %2380 = vmatpush1.msra.mxu0 0.0
    %2381 = vmatprep.subr.mxu0 0.0
    %2382 = vmatpush1.msra.mxu0 0.0
    %2383 = vmatprep.subr.mxu0 0.0
    %2384 = vmatpush1.msra.mxu0 0.0
    %2385 = vmatprep.subr.mxu0 0.0
    %2386 = vmatpush1.msra.mxu0 0.0
    %2387 = vmatprep.subr.mxu0 0.0
    %2388 = vmatpush1.msra.mxu0 0.0
    %2389 = vmatprep.subr.mxu0 0.0
    %2390 = vmatpush1.msra.mxu0 0.0
    %2391 = vmatprep.subr.mxu0 0.0
    %2392 = vmatpush1.msra.mxu0 0.0
    %2393 = vmatprep.subr.mxu0 0.0
    %2394 = vmatpush1.msra.mxu0 0.0
    %2395 = vmatprep.subr.mxu0 0.0
    %2396 = vmatpush1.msra.mxu0 0.0
    %2397 = vmatprep.subr.mxu0 0.0
    %2398 = vmatpush1.msra.mxu0 0.0
    %2399 = vmatprep.subr.mxu0 0.0
    %2400 = vmatpush1.msra.mxu0 0.0
    %2401 = vmatprep.subr.mxu0 0.0
    %2402 = vmatpush1.msra.mxu0 0.0
    %2403 = vmatprep.subr.mxu0 0.0
    %2404 = vmatpush1.msra.mxu0 0.0
    %2405 = vmatprep.subr.mxu0 0.0
    %2406 = vmatpush1.msra.mxu0 0.0
    %2407 = vmatprep.subr.mxu0 0.0
    %2408 = vmatpush1.msra.mxu0 0.0
    %2409 = vmatprep.subr.mxu0 0.0
    %2410 = vmatpush1.msra.mxu0 0.0
    %2411 = vmatprep.subr.mxu0 0.0
    %2412 = vmatpush1.msra.mxu0 0.0
    %2413 = vmatprep.subr.mxu0 0.0
    %2414 = vmatpush1.msra.mxu0 0.0
    %2415 = vmatprep.subr.mxu0 0.0
    %2416 = vmatpush1.msra.mxu0 0.0
    %2417 = vmatprep.subr.mxu0 0.0
    %2418 = vmatpush1.msra.mxu0 0.0
    %2419 = vmatprep.subr.mxu0 0.0
    %2420 = vmatpush1.msra.mxu0 0.0
    %2421 = vmatprep.subr.mxu0 0.0
    %2422 = vmatpush1.msra.mxu0 0.0
    %2423 = vmatprep.mubr.f32.mxu0 0.0
    %2424 = vmatmul.mubr.f32.gmra.mrb[0].mxu0 %v2354
    %v2425 = vpop.f32.mrb[0].mxu0
    %v2426 = vadd.f32 %v2351, %v2425
    %v2427 = vpop.f32.mrb[0].mxu0
    %2428 = vmatprep.mubr.f32.mxu0 0.0
    %2429 = vmatmul.mubr.f32.gmra.mrb[0].mxu0 %v2357
    %v2430 = vpop.f32.mrb[0].mxu0
    %v2431 = vadd.f32 %v2351, %v2430
    %v2432 = vpop.f32.mrb[0].mxu0
    %2433 = vdwg.mxu0
    %v2434 = vadd.f32 %v2205, %v2426
    %v2435 = vadd.f32 %v2206, %v2431
    %2436 = vst.msk [vmem:[#allocation5] sm:$0xff] %vm40, %v2434
    %2437 = vst.msk [vmem:[#allocation5 + $0x8] sm:$0xff] %vm40, %v2435
    // Predicated region
    $region14: #{decoder_layer.1} parent=1 // pred_check
      _
    $region15: #{decoder_layer.1} parent=1 // pred_check_branch
      %2439 = sbr.rel (0) target = $region17
    $region16: #{decoder_layer.1} parent=1 // pred_region
      %s2441 = ssub.s32 256, 256
      %2442 = vsyncadd [#allocation4], %s2441
      %s2443 = sshll.u32 [#allocation5], 4
      %s2444 = int_to_ptr.vmem [resolvable:$true] %s2443
      %2449 = dma.vmem_to_hbm [thread:$0]  %s2444, 256, %s2, [#allocation4], 128, 128, 8
    $region17: #{decoder_layer.1} parent=1 // pred_fallthru
      _
    // Predicated region
    $region18: #{decoder_layer.1} parent=1 // pred_check
      _
    $region19: #{decoder_layer.1} parent=1 // pred_check_branch
      %2451 = sbr.rel (0) target = $region21
    $region20: #{decoder_layer.1} parent=1 // pred_region
      %2452 = dma.done [#allocation4], 256
    $region21: #{decoder_layer.1} parent=1 // pred_fallthru
      _
    %2453 = vsyncpa [#allocation3], 1
    %2454 = vsyncpa [#allocation4], 1

</llo_original>
